<compile_context>
chip_gen: v7x
topology: tpu7x:2x2x1
jax: 0.10.0
libtpu: 0.0.40
codegen_flags: <defaults>
</compile_context>

<pallas_src>
import jax
import jax.numpy as jnp
from jax.experimental import pallas as pl
from jax.experimental.pallas import tpu as pltpu


# ----------------------------- Pallas kernel --------------------------------

def _density_kernel(z_ref, p_ref, o_ref):
    """Fused elementwise density model on one (TM, TN) tile.

    z_ref: (TM, TN)  zhat tile; rows = (batch*channel), lanes = flattened spatial.
    p_ref: (TM, 12)  per-row params
                     [sp1, sp2, sp3, b1+0.5*sp1, b1-0.5*sp1, b2, b3,
                      tanh(a1), tanh(a2), tanh(a3), 0.5*sp4, 0.5*b4]
    o_ref: (TM, TN)  prob tile.
    """
    z = z_ref[...].astype(jnp.float32)
    p = p_ref[...].astype(jnp.float32)

    # (TM, 1) per-row scalars; Mosaic lane-broadcasts these inside each vector op
    # (one-time per-tile cost on the otherwise-idle XLU slot).
    sp1 = p[:, 0:1]
    sp2 = p[:, 1:2]
    sp3 = p[:, 2:3]
    b1p = p[:, 3:4]
    b1m = p[:, 4:5]
    b2 = p[:, 5:6]
    b3 = p[:, 6:7]
    ta1 = p[:, 7:8]
    ta2 = p[:, 8:9]
    ta3 = p[:, 9:10]
    h_sp4 = p[:, 10:11]   # 0.5 * softplus(h4)
    h_b4 = p[:, 11:12]    # 0.5 * b4

    # Shared first multiply (the +/-0.5 shift is folded into b1p / b1m).
    t = z * sp1

    def flow_tanh(y):
        # Returns tanh(0.5*(f(y) * sp4 + b4)); sigmoid = 0.5*that + 0.5.
        y = y + jnp.tanh(y) * ta1
        y = y * sp2 + b2
        y = y + jnp.tanh(y) * ta2
        y = y * sp3 + b3
        y = y + jnp.tanh(y) * ta3
        return jnp.tanh(y * h_sp4 + h_b4)

    # sigmoid(u) - sigmoid(l) = 0.5*(tanh(u/2) - tanh(l/2)); the +0.5 terms cancel.
    prob = 0.5 * (flow_tanh(t + b1p) - flow_tanh(t + b1m))
    o_ref[...] = prob.astype(o_ref.dtype)


# ------------------------------- wrapper -------------------------------------

def _round_up(x, m):
    return (x + m - 1) // m * m


def _choose_tiles(m_rows, spatial):
    """Pick (tm, tn). Each block dim is a multiple of (8,128) or the full dim."""
    # Row (sublane) tile.
    if m_rows <= 256:
        tm = m_rows                      # full dim -> always a legal block dim
    else:
        tm = 256                         # multiple of 8; ragged last block is fine

    # Lane tile.
    if spatial <= 128:
        tn = spatial                     # full dim
    else:
        # Keep each f32 tile <= ~2 MiB so 2x(in) + 2x(out) double-buffering stays
        # under ~8 MiB (fits v5e's 16 MiB scoped VMEM default and v7x's 64 MiB).
        vmem_cap = max(128, ((2 * 1024 * 1024) // (4 * tm)) // 128 * 128)
        tn = min(_round_up(spatial, 128), 4096, vmem_cap)
        # Guarantee >=2 blocks total so both v7x TensorCores get work.
        if pl.cdiv(m_rows, tm) == 1:
            while pl.cdiv(spatial, tn) < 2 and tn > 128:
                tn = max(128, ((tn // 2) // 128) * 128)
    return tm, tn


def non_param_density_forward(zhat, params):
    """zhat: (N, C, D, H, W); params: dict of h1..h4, b1..b4, a1..a3 (C elements each)."""
    n, c, d, h, w = zhat.shape
    spatial = d * h * w
    m_rows = n * c

    # Per-channel scalar transforms done once in plain JAX (12*C values total).
    def chan(name):
        return jnp.asarray(params[name], jnp.float32).reshape(c)

    sp1 = jax.nn.softplus(chan("h1"))
    sp2 = jax.nn.softplus(chan("h2"))
    sp3 = jax.nn.softplus(chan("h3"))
    sp4 = jax.nn.softplus(chan("h4"))
    b1, b2, b3, b4 = chan("b1"), chan("b2"), chan("b3"), chan("b4")
    ta1, ta2, ta3 = jnp.tanh(chan("a1")), jnp.tanh(chan("a2")), jnp.tanh(chan("a3"))

    p_chan = jnp.stack(
        [sp1, sp2, sp3,
         b1 + 0.5 * sp1, b1 - 0.5 * sp1,     # +/-0.5 shift folded into first affine
         b2, b3,
         ta1, ta2, ta3,
         0.5 * sp4, 0.5 * b4],               # sigmoid-as-tanh scale folded in
        axis=-1)                              # (C, 12)
    p_rows = jnp.tile(p_chan, (n, 1))         # (N*C, 12): row r -> channel r % C

    # Lane-dense 2D view: rows = N*C, lanes = D*H*W (contiguous reshape, no copy).
    z2 = zhat.reshape(m_rows, spatial)

    tm, tn = _choose_tiles(m_rows, spatial)
    grid = (pl.cdiv(m_rows, tm), pl.cdiv(spatial, tn))

    n_elem = m_rows * spatial
    bytes_per = 2 * jnp.dtype(zhat.dtype).itemsize
    cost = pl.CostEstimate(flops=29 * n_elem,
                           transcendentals=8 * n_elem,
                           bytes_accessed=bytes_per * n_elem)

    out = pl.pallas_call(
        _density_kernel,
        out_shape=jax.ShapeDtypeStruct((m_rows, spatial), zhat.dtype),
        grid=grid,
        in_specs=[
            pl.BlockSpec((tm, tn), lambda i, j: (i, j)),   # zhat tile
            pl.BlockSpec((tm, 12), lambda i, j: (i, 0)),   # row params (lane-axis resident)
        ],
        out_specs=pl.BlockSpec((tm, tn), lambda i, j: (i, j)),
        compiler_params=pltpu.CompilerParams(
            dimension_semantics=("parallel", "parallel")),
        cost_estimate=cost,
    )(z2, p_rows)

    return out.reshape(n, c, d, h, w)


# --------------------------- pure-JAX reference -------------------------------

def _reference_forward(zhat, params):
    c = zhat.shape[1]

    def r(name):
        return jnp.asarray(params[name], jnp.float32).reshape(1, c, 1, 1, 1)

    h1, h2, h3, h4 = r("h1"), r("h2"), r("h3"), r("h4")
    b1, b2, b3, b4 = r("b1"), r("b2"), r("b3"), r("b4")
    a1, a2, a3 = r("a1"), r("a2"), r("a3")
    sp = jax.nn.softplus

    def cdf(zv):
        y = zv * sp(h1) + b1
        y = y + jnp.tanh(y) * jnp.tanh(a1)
        y = y * sp(h2) + b2
        y = y + jnp.tanh(y) * jnp.tanh(a2)
        y = y * sp(h3) + b3
        y = y + jnp.tanh(y) * jnp.tanh(a3)
        return jax.nn.sigmoid(y * sp(h4) + b4)

    return cdf(zhat + 0.5) - cdf(zhat - 0.5)


# --------------------------------- main ---------------------------------------

def init_params(code_length, key):
    names = ("h1", "h2", "h3", "h4", "b1", "b2", "b3", "b4", "a1", "a2", "a3")
    keys = jax.random.split(key, len(names))
    return {
        name: 0.01 * jax.random.normal(k, (1, code_length, 1, 1, 1), jnp.float32)
        for name, k in zip(names, keys)
    }


if __name__ == "__main__":
    key = jax.random.PRNGKey(0)
    k_x, k_p = jax.random.split(key)

    code_length = 8
    # PyTorch-convention input: (N, C=code_length, D, H, W)
    zhat = jax.random.normal(k_x, (2, code_length, 16, 16, 16), jnp.float32)
    params = init_params(code_length, k_p)

    prob = jax.block_until_ready(non_param_density_forward(zhat, params))
    assert prob.shape == zhat.shape, prob.shape

    prob_ref = jax.block_until_ready(_reference_forward(zhat, params))
    max_diff = float(jnp.max(jnp.abs(prob - prob_ref)))
    assert jnp.allclose(prob, prob_ref, rtol=1e-4, atol=1e-4), max_diff

    print("KERNEL_OK")
</pallas_src>

<mosaic_0001>
module attributes {stable_mosaic.version = 11 : i64} {
  func.func @_density_kernel(%arg0: i32, %arg1: i32, %arg2: memref<16x2048xf32, #tpu.memory_space<vmem>>, %arg3: memref<16x12xf32, #tpu.memory_space<vmem>>, %arg4: memref<16x2048xf32, #tpu.memory_space<vmem>>) attributes {dimension_semantics = [#tpu.dimension_semantics<parallel>, #tpu.dimension_semantics<parallel>], iteration_bounds = array<i64: 1, 2>, scalar_prefetch = 0 : i64, scratch_operands = 0 : i64, tpu.core_type = #tpu.core_type<tc>, window_params = [{transform_indices = @transform_0, window_bounds = array<i64: 16, 2048>}, {transform_indices = @transform_1, window_bounds = array<i64: 16, 12>}, {transform_indices = @transform_2, window_bounds = array<i64: 16, 2048>}]} {
    %c0 = arith.constant 0 : index
    %c0_0 = arith.constant 0 : index
    %0 = vector.load %arg2[%c0, %c0_0] : memref<16x2048xf32, #tpu.memory_space<vmem>>, vector<16x2048xf32>
    %c0_1 = arith.constant 0 : index
    %c0_2 = arith.constant 0 : index
    %1 = vector.load %arg3[%c0_1, %c0_2] : memref<16x12xf32, #tpu.memory_space<vmem>>, vector<16x12xf32>
    %2 = vector.extract_strided_slice %1 {offsets = [0, 0], sizes = [16, 1], strides = [1, 1]} : vector<16x12xf32> to vector<16x1xf32>
    %3 = vector.extract_strided_slice %1 {offsets = [0, 1], sizes = [16, 1], strides = [1, 1]} : vector<16x12xf32> to vector<16x1xf32>
    %4 = vector.extract_strided_slice %1 {offsets = [0, 2], sizes = [16, 1], strides = [1, 1]} : vector<16x12xf32> to vector<16x1xf32>
    %5 = vector.extract_strided_slice %1 {offsets = [0, 3], sizes = [16, 1], strides = [1, 1]} : vector<16x12xf32> to vector<16x1xf32>
    %6 = vector.extract_strided_slice %1 {offsets = [0, 4], sizes = [16, 1], strides = [1, 1]} : vector<16x12xf32> to vector<16x1xf32>
    %7 = vector.extract_strided_slice %1 {offsets = [0, 5], sizes = [16, 1], strides = [1, 1]} : vector<16x12xf32> to vector<16x1xf32>
    %8 = vector.extract_strided_slice %1 {offsets = [0, 6], sizes = [16, 1], strides = [1, 1]} : vector<16x12xf32> to vector<16x1xf32>
    %9 = vector.extract_strided_slice %1 {offsets = [0, 7], sizes = [16, 1], strides = [1, 1]} : vector<16x12xf32> to vector<16x1xf32>
    %10 = vector.extract_strided_slice %1 {offsets = [0, 8], sizes = [16, 1], strides = [1, 1]} : vector<16x12xf32> to vector<16x1xf32>
    %11 = vector.extract_strided_slice %1 {offsets = [0, 9], sizes = [16, 1], strides = [1, 1]} : vector<16x12xf32> to vector<16x1xf32>
    %12 = vector.extract_strided_slice %1 {offsets = [0, 10], sizes = [16, 1], strides = [1, 1]} : vector<16x12xf32> to vector<16x1xf32>
    %13 = vector.extract_strided_slice %1 {offsets = [0, 11], sizes = [16, 1], strides = [1, 1]} : vector<16x12xf32> to vector<16x1xf32>
    %14 = vector.broadcast %2 : vector<16x1xf32> to vector<16x2048xf32>
    %15 = arith.mulf %0, %14 : vector<16x2048xf32>
    %16 = vector.broadcast %5 : vector<16x1xf32> to vector<16x2048xf32>
    %17 = arith.addf %15, %16 : vector<16x2048xf32>
    %18 = math.tanh %17 : vector<16x2048xf32>
    %19 = vector.broadcast %9 : vector<16x1xf32> to vector<16x2048xf32>
    %20 = arith.mulf %18, %19 : vector<16x2048xf32>
    %21 = arith.addf %17, %20 : vector<16x2048xf32>
    %22 = vector.broadcast %3 : vector<16x1xf32> to vector<16x2048xf32>
    %23 = arith.mulf %21, %22 : vector<16x2048xf32>
    %24 = vector.broadcast %7 : vector<16x1xf32> to vector<16x2048xf32>
    %25 = arith.addf %23, %24 : vector<16x2048xf32>
    %26 = math.tanh %25 : vector<16x2048xf32>
    %27 = vector.broadcast %10 : vector<16x1xf32> to vector<16x2048xf32>
    %28 = arith.mulf %26, %27 : vector<16x2048xf32>
    %29 = arith.addf %25, %28 : vector<16x2048xf32>
    %30 = vector.broadcast %4 : vector<16x1xf32> to vector<16x2048xf32>
    %31 = arith.mulf %29, %30 : vector<16x2048xf32>
    %32 = vector.broadcast %8 : vector<16x1xf32> to vector<16x2048xf32>
    %33 = arith.addf %31, %32 : vector<16x2048xf32>
    %34 = math.tanh %33 : vector<16x2048xf32>
    %35 = vector.broadcast %11 : vector<16x1xf32> to vector<16x2048xf32>
    %36 = arith.mulf %34, %35 : vector<16x2048xf32>
    %37 = arith.addf %33, %36 : vector<16x2048xf32>
    %38 = vector.broadcast %12 : vector<16x1xf32> to vector<16x2048xf32>
    %39 = arith.mulf %37, %38 : vector<16x2048xf32>
    %40 = vector.broadcast %13 : vector<16x1xf32> to vector<16x2048xf32>
    %41 = arith.addf %39, %40 : vector<16x2048xf32>
    %42 = math.tanh %41 : vector<16x2048xf32>
    %43 = vector.broadcast %6 : vector<16x1xf32> to vector<16x2048xf32>
    %44 = arith.addf %15, %43 : vector<16x2048xf32>
    %45 = math.tanh %44 : vector<16x2048xf32>
    %46 = vector.broadcast %9 : vector<16x1xf32> to vector<16x2048xf32>
    %47 = arith.mulf %45, %46 : vector<16x2048xf32>
    %48 = arith.addf %44, %47 : vector<16x2048xf32>
    %49 = vector.broadcast %3 : vector<16x1xf32> to vector<16x2048xf32>
    %50 = arith.mulf %48, %49 : vector<16x2048xf32>
    %51 = vector.broadcast %7 : vector<16x1xf32> to vector<16x2048xf32>
    %52 = arith.addf %50, %51 : vector<16x2048xf32>
    %53 = math.tanh %52 : vector<16x2048xf32>
    %54 = vector.broadcast %10 : vector<16x1xf32> to vector<16x2048xf32>
    %55 = arith.mulf %53, %54 : vector<16x2048xf32>
    %56 = arith.addf %52, %55 : vector<16x2048xf32>
    %57 = vector.broadcast %4 : vector<16x1xf32> to vector<16x2048xf32>
    %58 = arith.mulf %56, %57 : vector<16x2048xf32>
    %59 = vector.broadcast %8 : vector<16x1xf32> to vector<16x2048xf32>
    %60 = arith.addf %58, %59 : vector<16x2048xf32>
    %61 = math.tanh %60 : vector<16x2048xf32>
    %62 = vector.broadcast %11 : vector<16x1xf32> to vector<16x2048xf32>
    %63 = arith.mulf %61, %62 : vector<16x2048xf32>
    %64 = arith.addf %60, %63 : vector<16x2048xf32>
    %65 = vector.broadcast %12 : vector<16x1xf32> to vector<16x2048xf32>
    %66 = arith.mulf %64, %65 : vector<16x2048xf32>
    %67 = vector.broadcast %13 : vector<16x1xf32> to vector<16x2048xf32>
    %68 = arith.addf %66, %67 : vector<16x2048xf32>
    %69 = math.tanh %68 : vector<16x2048xf32>
    %70 = arith.subf %42, %69 : vector<16x2048xf32>
    %cst = arith.constant 5.000000e-01 : f32
    %71 = vector.broadcast %cst : f32 to vector<16x2048xf32>
    %72 = arith.mulf %71, %70 : vector<16x2048xf32>
    %c0_3 = arith.constant 0 : index
    %c0_4 = arith.constant 0 : index
    %73 = vector.load %arg4[%c0_3, %c0_4] : memref<16x2048xf32, #tpu.memory_space<vmem>>, vector<16x2048xf32>
    tpu.vector_store %arg4[%c0_3, %c0_4], %72 {strides = array<i32>} : memref<16x2048xf32, #tpu.memory_space<vmem>>, vector<16x2048xf32>,
    return
  }
  func.func @transform_0(%arg0: i32, %arg1: i32) -> (i32, i32) {
    %c0_i32 = arith.constant 0 : i32
    return %arg0, %arg1 : i32, i32
  }
  func.func @transform_1(%arg0: i32, %arg1: i32) -> (i32, i32) {
    %c0_i32 = arith.constant 0 : i32
    %c0_i32_0 = arith.constant 0 : i32
    return %arg0, %c0_i32 : i32, i32
  }
  func.func @transform_2(%arg0: i32, %arg1: i32) -> (i32, i32) {
    %c0_i32 = arith.constant 0 : i32
    return %arg0, %arg1 : i32, i32
  }
}

</mosaic_0001>

<llo_original>
// kernel: tpu_custom_call.1
$region0: #{tpu_custom_call.1}
  #allocation0 [shape = 'u32[]', space=smem, size = 0x4, offset = 0x4, fixed_abs, tag = 'smem constant byte address 0x4 - core index']
  #allocation1 [shape = 'u32[144,128]{1,0:T(1,128)}', space=vmem, size = 0x12000, scoped, tag = 'internal scratch']
  %s0 = inlined_call_operand.hbm [shape: f32[16,4096], index: 0, kind: input, shape index: {}]
  %s1 = inlined_call_operand.hbm [shape: f32[16,12], index: 1, kind: input, shape index: {}]
  %s2 = inlined_call_operand.hbm [shape: f32[16,4096], index: 2, kind: output, shape index: {}]
  %s3 = sld [smem:[#allocation0]]
  $region49: #{tpu_custom_call.1} parent=0
    _
  %s5 = ssub.s32 1, %s3
  %s6 = scalar_select 0, %s5, %s3
  $region1: #{tpu_custom_call.1} parent=0
    #allocation2 [shape = 'u8[262144]{0}', space=vmem, size = 0x40000, scoped, tag = 'input window, operand 0']
    #allocation3 [shape = 's32[2]{0}', space=sflag, size = 0x8, scoped, tag = 'scoped memory for tpu_custom_call.1']
    #allocation4 [shape = 's32[2]{0}', space=sflag, size = 0x8, scoped, tag = 'scoped memory for tpu_custom_call.1']
    #allocation5 [shape = 'u8[8192]{0}', space=vmem, size = 0x2000, scoped, tag = 'input window, operand 1, single buffered']
    #allocation6 [shape = 's32[1]{0}', space=sflag, size = 0x4, scoped, tag = 'scoped memory for tpu_custom_call.1']
    #allocation7 [shape = 'u8[262144]{0}', space=vmem, size = 0x40000, scoped, tag = 'output window, operand 0']
    %7 = vsyncpa [#allocation3], 0
    %s8 = scalar_lea.sflag [#allocation3], 1
    %9 = vsyncpa %s8, 0
    %10 = vsyncpa [#allocation6], 0
    %11 = vsyncpa [#allocation4], 0
    %s12 = scalar_lea.sflag [#allocation4], 1
    %13 = vsyncpa %s12, 0
    loop: start=0, step=1, limit=4
    $region2: #{tpu_custom_call.1} parent=1 // loop_pre_header
      _
    $region3: #{tpu_custom_call.1} parent=1 // loop_header
      %s15 = sphi 0, %s19
      %p16 = scmp.ge.s32.totalorder %s15, 4
      %s22 = sphi 0, %s34
      %s23 = sphi 0, %s30
      %s24 = sphi 0, %s22
      %s25 = sphi 0, %s23
      %s26 = sphi 0, %s24
      %s27 = sphi 0, %s25
      %s39 = sphi 0, %s41
      %s42 = sphi 0, %s39
      %s43 = sphi 0, %s42
      %s59 = sphi 0, %s43
      %s65 = sphi 0, %s67
      %s68 = sphi 0, %s65
      %s69 = sphi 0, %s68
      %s85 = sphi 0, %s69
      %s93 = sphi 0, %s95
      %s96 = sphi 0, %s93
      %s97 = sphi 0, %s96
      %s113 = sphi 0, %s97
    $region4: #{tpu_custom_call.1} parent=1 // loop_header_branch
      %18 = sbr.rel (%p16) target = $region8
    $region5: #{tpu_custom_call.1} parent=1 // loop_body
      %s20 = ssub.s32 %s15, 1
      %s21 = ssub.s32 %s15, 2
      %s28 = sadd.s32 1, %s23
      %p29 = scmp.ge.s32.totalorder %s28, 2
      %s30 = scalar_select %p29, 0, %s28
      %s31 = sadd.s32 1, %s22
      %s32 = scalar_select %p29, %s31, %s22
      %p33 = scmp.ge.s32.totalorder %s32, 1
      %s34 = scalar_select %p33, 0, %s32
      %s35 = ssub.s32 %s22, %s34
      %s36 = ssub.s32 %s23, %s30
      %s37 = sor.u32 %s35, %s36
      %p38 = scmp.eq.s32.totalorder %s37, 0
      %s40 = sadd.s32 %s39, 1
      %s41 = scalar_select %p38, %s39, %s40
      %p44 = pneg %p38
      %p45 = scmp.eq.s32.totalorder %s15, 1
      %p46 = por %p44, %p45
      %p47 = scmp.ne.s32.totalorder %s39, %s42
      %p48 = scmp.eq.s32.totalorder %s15, 0
      %p49 = por %p47, %p48
      %p50 = scmp.ne.s32.totalorder %s39, %s42
      %p51 = scmp.eq.s32.totalorder %s20, 1
      %p52 = por %p50, %p51
      %p53 = scmp.ne.s32.totalorder %s42, %s43
      %p54 = scmp.eq.s32.totalorder %s20, 0
      %p55 = por %p53, %p54
      %p56 = scmp.ne.s32.totalorder %s42, %s43
      %p57 = scmp.eq.s32.totalorder %s21, 1
      %p58 = por %p56, %p57
      %p60 = scmp.ne.s32.totalorder %s43, %s59
      %p61 = scmp.eq.s32.totalorder %s21, 0
      %p62 = por %p60, %p61
      %s63 = ssub.s32 %s22, %s34
      %p64 = scmp.eq.s32.totalorder %s63, 0
      %s66 = sadd.s32 %s65, 1
      %s67 = scalar_select %p64, %s65, %s66
      %p70 = pneg %p64
      %p71 = scmp.eq.s32.totalorder %s15, 1
      %p72 = por %p70, %p71
      %p73 = scmp.ne.s32.totalorder %s65, %s68
      %p74 = scmp.eq.s32.totalorder %s15, 0
      %p75 = por %p73, %p74
      %p76 = scmp.ne.s32.totalorder %s65, %s68
      %p77 = scmp.eq.s32.totalorder %s20, 1
      %p78 = por %p76, %p77
      %p79 = scmp.ne.s32.totalorder %s68, %s69
      %p80 = scmp.eq.s32.totalorder %s20, 0
      %p81 = por %p79, %p80
      %p82 = scmp.ne.s32.totalorder %s68, %s69
      %p83 = scmp.eq.s32.totalorder %s21, 1
      %p84 = por %p82, %p83
      %p86 = scmp.ne.s32.totalorder %s69, %s85
      %p87 = scmp.eq.s32.totalorder %s21, 0
      %p88 = por %p86, %p87
      %s89 = ssub.s32 %s22, %s34
      %s90 = ssub.s32 %s23, %s30
      %s91 = sor.u32 %s89, %s90
      %p92 = scmp.eq.s32.totalorder %s91, 0
      %s94 = sadd.s32 %s93, 1
      %s95 = scalar_select %p92, %s93, %s94
      %p98 = pneg %p92
      %p99 = scmp.eq.s32.totalorder %s15, 1
      %p100 = por %p98, %p99
      %p101 = scmp.ne.s32.totalorder %s93, %s96
      %p102 = scmp.eq.s32.totalorder %s15, 0
      %p103 = por %p101, %p102
      %p104 = scmp.ne.s32.totalorder %s93, %s96
      %p105 = scmp.eq.s32.totalorder %s20, 1
      %p106 = por %p104, %p105
      %p107 = scmp.ne.s32.totalorder %s96, %s97
      %p108 = scmp.eq.s32.totalorder %s20, 0
      %p109 = por %p107, %p108
      %p110 = scmp.ne.s32.totalorder %s96, %s97
      %p111 = scmp.eq.s32.totalorder %s21, 1
      %p112 = por %p110, %p111
      %p114 = scmp.ne.s32.totalorder %s97, %s113
      %p115 = scmp.eq.s32.totalorder %s21, 0
      %p116 = por %p114, %p115
      %p117 = scmp.le.s32.totalorder 1, %s15
      %p118 = scmp.lt.s32.totalorder %s15, 3
      %p119 = pnand %p117, %p118
      %p120 = pneg %p119
      // Predicated region
      $region9: #{tpu_custom_call.1} parent=5 // pred_check
        _
      $region10: #{tpu_custom_call.1} parent=5 // pred_check_branch
        %122 = sbr.rel (%p119) target = $region12
      $region11: #{tpu_custom_call.1} parent=5 // pred_region
        %s123 = ssub.s32 %s15, 1
        // Predicated region
        $region13: #{tpu_custom_call.1} parent=11 // pred_check
          %p124 = pneg %p81
        $region14: #{tpu_custom_call.1} parent=11 // pred_check_branch
          %126 = sbr.rel (%p124) target = $region16
        $region15: #{tpu_custom_call.1} parent=11 // pred_region
          %s127 = smul.u32 2, %s24
          %s129 = ssub.s32 256, 256
          %130 = vsyncadd [#allocation6], %s129
          %s131 = smul.addr %s127, 128
          %s132 = scalar_lea.hbm %s1, %s131
          %s133 = sshll.u32 [#allocation5], 4
          %s134 = int_to_ptr.vmem [resolvable:$true] %s133
          %139 = dma.hbm_to_vmem [thread:$0]  %s132, 256, %s134, [#allocation6], 128, 128, 8
        $region16: #{tpu_custom_call.1} parent=11 // pred_fallthru
          _
      $region12: #{tpu_custom_call.1} parent=5 // pred_fallthru
        _
      %p140 = scmp.lt.s32.totalorder %s15, 2
      // Predicated region
      $region17: #{tpu_custom_call.1} parent=5 // pred_check
        %p141 = pneg %p140
      $region18: #{tpu_custom_call.1} parent=5 // pred_check_branch
        %143 = sbr.rel (%p141) target = $region20
      $region19: #{tpu_custom_call.1} parent=5 // pred_region
        // Predicated region
        $region21: #{tpu_custom_call.1} parent=19 // pred_check
          %p144 = pneg %p49
        $region22: #{tpu_custom_call.1} parent=19 // pred_check_branch
          %146 = sbr.rel (%p144) target = $region24
        $region23: #{tpu_custom_call.1} parent=19 // pred_region
          %s147 = sand.u32 %s39, 1
          %s148 = scalar_lea.sflag [#allocation3], %s147
          %s149 = sand.u32 %s39, 1
          %s150 = smul.addr %s149, 256
          %s151 = scalar_lea.vmem [#allocation2], %s150
          %s152 = smul.u32 2, %s22
          %s153 = smul.u32 16, %s23
          %s155 = ssub.s32 4096, 4096
          %156 = vsyncadd %s148, %s155
          %s157 = smul.addr %s152, 32
          %s158 = sadd.s32 %s153, %s157
          %s159 = smul.addr %s158, 128
          %s160 = scalar_lea.hbm %s0, %s159
          %s161 = sshll.u32 %s151, 4
          %s162 = int_to_ptr.vmem [resolvable:$true] %s161
          %167 = dma.hbm_to_vmem [thread:$0]  %s160, 4096, %s162, %s148, 4096, 2048, 128
        $region24: #{tpu_custom_call.1} parent=19 // pred_fallthru
          _
      $region20: #{tpu_custom_call.1} parent=5 // pred_fallthru
        _
      %p168 = scmp.le.s32.totalorder 1, %s15
      %p169 = scmp.lt.s32.totalorder %s15, 3
      %p170 = pnand %p168, %p169
      %p171 = pneg %p170
      // Predicated region
      $region25: #{tpu_custom_call.1} parent=5 // pred_check
        _
      $region26: #{tpu_custom_call.1} parent=5 // pred_check_branch
        %173 = sbr.rel (%p170) target = $region28
      $region27: #{tpu_custom_call.1} parent=5 // pred_region
        %s174 = ssub.s32 %s15, 1
        %s175 = sand.u32 %s42, 1
        %s176 = scalar_lea.sflag [#allocation3], %s175
        %s177 = sand.u32 %s42, 1
        %s178 = smul.addr %s177, 256
        %s179 = scalar_lea.vmem [#allocation2], %s178
        // Predicated region
        $region29: #{tpu_custom_call.1} parent=27 // pred_check
          %p180 = pneg %p55
        $region30: #{tpu_custom_call.1} parent=27 // pred_check_branch
          %182 = sbr.rel (%p180) target = $region32
        $region31: #{tpu_custom_call.1} parent=27 // pred_region
          %183 = dma.done %s176, 4096
        $region32: #{tpu_custom_call.1} parent=27 // pred_fallthru
          _
        // Predicated region
        $region33: #{tpu_custom_call.1} parent=27 // pred_check
          %p184 = pneg %p81
        $region34: #{tpu_custom_call.1} parent=27 // pred_check_branch
          %186 = sbr.rel (%p184) target = $region36
        $region35: #{tpu_custom_call.1} parent=27 // pred_region
          %187 = dma.done [#allocation6], 256
        $region36: #{tpu_custom_call.1} parent=27 // pred_fallthru
          _
        %s188 = sand.u32 %s42, 1
        %s189 = scalar_lea.sflag [#allocation3], %s188
        %s190 = sand.u32 %s42, 1
        %s191 = smul.addr %s190, 256
        %s192 = scalar_lea.vmem [#allocation2], %s191
        %p193 = pneg %p55
        %p194 = pneg %p52
        %p195 = pneg %p81
        %p196 = pneg %p78
        %p197 = pneg %p109
        %p198 = pneg %p106
        %s199 = sand.u32 %s96, 1
        %s200 = scalar_lea.sflag [#allocation4], %s199
        %s201 = sand.u32 %s96, 1
        %s202 = smul.addr %s201, 256
        %s203 = scalar_lea.vmem [#allocation7], %s202
        %s204 = smul.u32 2, %s24
        %s205 = smul.u32 16, %s25
        %s206 = smul.u32 2, %s24
        %s207 = smul.u32 2, %s24
        %s208 = smul.u32 16, %s25
        %v209 = vld [vmem:[%s179] sm:$0xff]
        %v210 = vld [vmem:[%s179 + $0x8] sm:$0xff]
        %v211 = vld [vmem:[%s179 + $0x10] sm:$0xff]
        %v212 = vld [vmem:[%s179 + $0x18] sm:$0xff]
        %v213 = vld [vmem:[%s179 + $0x20] sm:$0xff]
        %v214 = vld [vmem:[%s179 + $0x28] sm:$0xff]
        %v215 = vld [vmem:[%s179 + $0x30] sm:$0xff]
        %v216 = vld [vmem:[%s179 + $0x38] sm:$0xff]
        %v217 = vld [vmem:[%s179 + $0x40] sm:$0xff]
        %v218 = vld [vmem:[%s179 + $0x48] sm:$0xff]
        %v219 = vld [vmem:[%s179 + $0x50] sm:$0xff]
        %v220 = vld [vmem:[%s179 + $0x58] sm:$0xff]
        %v221 = vld [vmem:[%s179 + $0x60] sm:$0xff]
        %v222 = vld [vmem:[%s179 + $0x68] sm:$0xff]
        %v223 = vld [vmem:[%s179 + $0x70] sm:$0xff]
        %v224 = vld [vmem:[%s179 + $0x78] sm:$0xff]
        %v225 = vld [vmem:[%s179 + $0x80] sm:$0xff]
        %v226 = vld [vmem:[%s179 + $0x88] sm:$0xff]
        %v227 = vld [vmem:[%s179 + $0x90] sm:$0xff]
        %v228 = vld [vmem:[%s179 + $0x98] sm:$0xff]
        %v229 = vld [vmem:[%s179 + $0xa0] sm:$0xff]
        %v230 = vld [vmem:[%s179 + $0xa8] sm:$0xff]
        %v231 = vld [vmem:[%s179 + $0xb0] sm:$0xff]
        %v232 = vld [vmem:[%s179 + $0xb8] sm:$0xff]
        %v233 = vld [vmem:[%s179 + $0xc0] sm:$0xff]
        %v234 = vld [vmem:[%s179 + $0xc8] sm:$0xff]
        %v235 = vld [vmem:[%s179 + $0xd0] sm:$0xff]
        %v236 = vld [vmem:[%s179 + $0xd8] sm:$0xff]
        %v237 = vld [vmem:[%s179 + $0xe0] sm:$0xff]
        %v238 = vld [vmem:[%s179 + $0xe8] sm:$0xff]
        %v239 = vld [vmem:[%s179 + $0xf0] sm:$0xff]
        %v240 = vld [vmem:[%s179 + $0xf8] sm:$0xff]
        %v241 = vld [vmem:[#allocation5] sm:$0xff]
        %v242 = vld [vmem:[#allocation5 + $0x8] sm:$0xff]
        %244 = vset.pattern.permute.xlu0 0
        %245 = vperm.xlu0 %244, %v241
        %v246 = vpop.permute.xlu0 %245
        %249 = vset.pattern.permute.xlu0 0
        %250 = vperm.xlu0 %249, %v242
        %v251 = vpop.permute.xlu0 %250
        %v253 = vmul.f32 %v209, %v246
        %v254 = vmul.f32 %v210, %v246
        %v255 = vmul.f32 %v211, %v246
        %v256 = vmul.f32 %v212, %v246
        %v257 = vmul.f32 %v213, %v246
        %v258 = vmul.f32 %v214, %v246
        %v259 = vmul.f32 %v215, %v246
        %v260 = vmul.f32 %v216, %v246
        %v261 = vmul.f32 %v217, %v246
        %v262 = vmul.f32 %v218, %v246
        %v263 = vmul.f32 %v219, %v246
        %v264 = vmul.f32 %v220, %v246
        %v265 = vmul.f32 %v221, %v246
        %v266 = vmul.f32 %v222, %v246
        %v267 = vmul.f32 %v223, %v246
        %v268 = vmul.f32 %v224, %v246
        %v269 = vmul.f32 %v225, %v251
        %v270 = vmul.f32 %v226, %v251
        %v271 = vmul.f32 %v227, %v251
        %v272 = vmul.f32 %v228, %v251
        %v273 = vmul.f32 %v229, %v251
        %v274 = vmul.f32 %v230, %v251
        %v275 = vmul.f32 %v231, %v251
        %v276 = vmul.f32 %v232, %v251
        %v277 = vmul.f32 %v233, %v251
        %v278 = vmul.f32 %v234, %v251
        %v279 = vmul.f32 %v235, %v251
        %v280 = vmul.f32 %v236, %v251
        %v281 = vmul.f32 %v237, %v251
        %v282 = vmul.f32 %v238, %v251
        %v283 = vmul.f32 %v239, %v251
        %v284 = vmul.f32 %v240, %v251
        %285 = vset.pattern.permute.xlu0 3
        %286 = vperm.xlu0 %285, %v241
        %v287 = vpop.permute.xlu0 %286
        %289 = vset.pattern.permute.xlu0 3
        %290 = vperm.xlu0 %289, %v242
        %v291 = vpop.permute.xlu0 %290
        %v293 = vadd.f32 %v253, %v287
        %v294 = vadd.f32 %v254, %v287
        %v295 = vadd.f32 %v255, %v287
        %v296 = vadd.f32 %v256, %v287
        %v297 = vadd.f32 %v257, %v287
        %v298 = vadd.f32 %v258, %v287
        %v299 = vadd.f32 %v259, %v287
        %v300 = vadd.f32 %v260, %v287
        %v301 = vadd.f32 %v261, %v287
        %v302 = vadd.f32 %v262, %v287
        %v303 = vadd.f32 %v263, %v287
        %v304 = vadd.f32 %v264, %v287
        %v305 = vadd.f32 %v265, %v287
        %v306 = vadd.f32 %v266, %v287
        %v307 = vadd.f32 %v267, %v287
        %v308 = vadd.f32 %v268, %v287
        %v309 = vadd.f32 %v269, %v291
        %v310 = vadd.f32 %v270, %v291
        %v311 = vadd.f32 %v271, %v291
        %v312 = vadd.f32 %v272, %v291
        %v313 = vadd.f32 %v273, %v291
        %v314 = vadd.f32 %v274, %v291
        %v315 = vadd.f32 %v275, %v291
        %v316 = vadd.f32 %v276, %v291
        %v317 = vadd.f32 %v277, %v291
        %v318 = vadd.f32 %v278, %v291
        %v319 = vadd.f32 %v279, %v291
        %v320 = vadd.f32 %v280, %v291
        %v321 = vadd.f32 %v281, %v291
        %v322 = vadd.f32 %v282, %v291
        %v323 = vadd.f32 %v283, %v291
        %v324 = vadd.f32 %v284, %v291
        %v325 = vtanh.pop %v293
        %v326 = vtanh.pop %v294
        %v327 = vtanh.pop %v295
        %v328 = vtanh.pop %v296
        %v329 = vtanh.pop %v297
        %v330 = vtanh.pop %v298
        %v331 = vtanh.pop %v299
        %v332 = vtanh.pop %v300
        %v333 = vtanh.pop %v301
        %v334 = vtanh.pop %v302
        %v335 = vtanh.pop %v303
        %v336 = vtanh.pop %v304
        %v337 = vtanh.pop %v305
        %v338 = vtanh.pop %v306
        %v339 = vtanh.pop %v307
        %v340 = vtanh.pop %v308
        %v341 = vtanh.pop %v309
        %v342 = vtanh.pop %v310
        %v343 = vtanh.pop %v311
        %v344 = vtanh.pop %v312
        %v345 = vtanh.pop %v313
        %v346 = vtanh.pop %v314
        %v347 = vtanh.pop %v315
        %v348 = vtanh.pop %v316
        %v349 = vtanh.pop %v317
        %v350 = vtanh.pop %v318
        %v351 = vtanh.pop %v319
        %v352 = vtanh.pop %v320
        %v353 = vtanh.pop %v321
        %v354 = vtanh.pop %v322
        %v355 = vtanh.pop %v323
        %v356 = vtanh.pop %v324
        %357 = vset.pattern.permute.xlu0 7
        %358 = vperm.xlu0 %357, %v241
        %v359 = vpop.permute.xlu0 %358
        %361 = vset.pattern.permute.xlu0 7
        %362 = vperm.xlu0 %361, %v242
        %v363 = vpop.permute.xlu0 %362
        %v365 = vmul.f32 %v325, %v359
        %v366 = vmul.f32 %v326, %v359
        %v367 = vmul.f32 %v327, %v359
        %v368 = vmul.f32 %v328, %v359
        %v369 = vmul.f32 %v329, %v359
        %v370 = vmul.f32 %v330, %v359
        %v371 = vmul.f32 %v331, %v359
        %v372 = vmul.f32 %v332, %v359
        %v373 = vmul.f32 %v333, %v359
        %v374 = vmul.f32 %v334, %v359
        %v375 = vmul.f32 %v335, %v359
        %v376 = vmul.f32 %v336, %v359
        %v377 = vmul.f32 %v337, %v359
        %v378 = vmul.f32 %v338, %v359
        %v379 = vmul.f32 %v339, %v359
        %v380 = vmul.f32 %v340, %v359
        %v381 = vmul.f32 %v341, %v363
        %v382 = vmul.f32 %v342, %v363
        %v383 = vmul.f32 %v343, %v363
        %v384 = vmul.f32 %v344, %v363
        %v385 = vmul.f32 %v345, %v363
        %v386 = vmul.f32 %v346, %v363
        %v387 = vmul.f32 %v347, %v363
        %v388 = vmul.f32 %v348, %v363
        %v389 = vmul.f32 %v349, %v363
        %v390 = vmul.f32 %v350, %v363
        %v391 = vmul.f32 %v351, %v363
        %v392 = vmul.f32 %v352, %v363
        %v393 = vmul.f32 %v353, %v363
        %v394 = vmul.f32 %v354, %v363
        %v395 = vmul.f32 %v355, %v363
        %v396 = vmul.f32 %v356, %v363
        %v397 = vadd.f32 %v293, %v365
        %v398 = vadd.f32 %v294, %v366
        %v399 = vadd.f32 %v295, %v367
        %v400 = vadd.f32 %v296, %v368
        %v401 = vadd.f32 %v297, %v369
        %v402 = vadd.f32 %v298, %v370
        %v403 = vadd.f32 %v299, %v371
        %v404 = vadd.f32 %v300, %v372
        %v405 = vadd.f32 %v301, %v373
        %v406 = vadd.f32 %v302, %v374
        %v407 = vadd.f32 %v303, %v375
        %v408 = vadd.f32 %v304, %v376
        %v409 = vadd.f32 %v305, %v377
        %v410 = vadd.f32 %v306, %v378
        %v411 = vadd.f32 %v307, %v379
        %v412 = vadd.f32 %v308, %v380
        %v413 = vadd.f32 %v309, %v381
        %v414 = vadd.f32 %v310, %v382
        %v415 = vadd.f32 %v311, %v383
        %v416 = vadd.f32 %v312, %v384
        %v417 = vadd.f32 %v313, %v385
        %v418 = vadd.f32 %v314, %v386
        %v419 = vadd.f32 %v315, %v387
        %v420 = vadd.f32 %v316, %v388
        %v421 = vadd.f32 %v317, %v389
        %v422 = vadd.f32 %v318, %v390
        %v423 = vadd.f32 %v319, %v391
        %v424 = vadd.f32 %v320, %v392
        %v425 = vadd.f32 %v321, %v393
        %v426 = vadd.f32 %v322, %v394
        %v427 = vadd.f32 %v323, %v395
        %v428 = vadd.f32 %v324, %v396
        %429 = vset.pattern.permute.xlu0 1
        %430 = vperm.xlu0 %429, %v241
        %v431 = vpop.permute.xlu0 %430
        %433 = vset.pattern.permute.xlu0 1
        %434 = vperm.xlu0 %433, %v242
        %v435 = vpop.permute.xlu0 %434
        %v437 = vmul.f32 %v397, %v431
        %v438 = vmul.f32 %v398, %v431
        %v439 = vmul.f32 %v399, %v431
        %v440 = vmul.f32 %v400, %v431
        %v441 = vmul.f32 %v401, %v431
        %v442 = vmul.f32 %v402, %v431
        %v443 = vmul.f32 %v403, %v431
        %v444 = vmul.f32 %v404, %v431
        %v445 = vmul.f32 %v405, %v431
        %v446 = vmul.f32 %v406, %v431
        %v447 = vmul.f32 %v407, %v431
        %v448 = vmul.f32 %v408, %v431
        %v449 = vmul.f32 %v409, %v431
        %v450 = vmul.f32 %v410, %v431
        %v451 = vmul.f32 %v411, %v431
        %v452 = vmul.f32 %v412, %v431
        %v453 = vmul.f32 %v413, %v435
        %v454 = vmul.f32 %v414, %v435
        %v455 = vmul.f32 %v415, %v435
        %v456 = vmul.f32 %v416, %v435
        %v457 = vmul.f32 %v417, %v435
        %v458 = vmul.f32 %v418, %v435
        %v459 = vmul.f32 %v419, %v435
        %v460 = vmul.f32 %v420, %v435
        %v461 = vmul.f32 %v421, %v435
        %v462 = vmul.f32 %v422, %v435
        %v463 = vmul.f32 %v423, %v435
        %v464 = vmul.f32 %v424, %v435
        %v465 = vmul.f32 %v425, %v435
        %v466 = vmul.f32 %v426, %v435
        %v467 = vmul.f32 %v427, %v435
        %v468 = vmul.f32 %v428, %v435
        %469 = vset.pattern.permute.xlu0 5
        %470 = vperm.xlu0 %469, %v241
        %v471 = vpop.permute.xlu0 %470
        %473 = vset.pattern.permute.xlu0 5
        %474 = vperm.xlu0 %473, %v242
        %v475 = vpop.permute.xlu0 %474
        %v477 = vadd.f32 %v437, %v471
        %v478 = vadd.f32 %v438, %v471
        %v479 = vadd.f32 %v439, %v471
        %v480 = vadd.f32 %v440, %v471
        %v481 = vadd.f32 %v441, %v471
        %v482 = vadd.f32 %v442, %v471
        %v483 = vadd.f32 %v443, %v471
        %v484 = vadd.f32 %v444, %v471
        %v485 = vadd.f32 %v445, %v471
        %v486 = vadd.f32 %v446, %v471
        %v487 = vadd.f32 %v447, %v471
        %v488 = vadd.f32 %v448, %v471
        %v489 = vadd.f32 %v449, %v471
        %v490 = vadd.f32 %v450, %v471
        %v491 = vadd.f32 %v451, %v471
        %v492 = vadd.f32 %v452, %v471
        %v493 = vadd.f32 %v453, %v475
        %v494 = vadd.f32 %v454, %v475
        %v495 = vadd.f32 %v455, %v475
        %v496 = vadd.f32 %v456, %v475
        %v497 = vadd.f32 %v457, %v475
        %v498 = vadd.f32 %v458, %v475
        %v499 = vadd.f32 %v459, %v475
        %v500 = vadd.f32 %v460, %v475
        %v501 = vadd.f32 %v461, %v475
        %v502 = vadd.f32 %v462, %v475
        %v503 = vadd.f32 %v463, %v475
        %v504 = vadd.f32 %v464, %v475
        %v505 = vadd.f32 %v465, %v475
        %v506 = vadd.f32 %v466, %v475
        %v507 = vadd.f32 %v467, %v475
        %v508 = vadd.f32 %v468, %v475
        %v509 = vtanh.pop %v477
        %v510 = vtanh.pop %v478
        %v511 = vtanh.pop %v479
        %v512 = vtanh.pop %v480
        %v513 = vtanh.pop %v481
        %v514 = vtanh.pop %v482
        %v515 = vtanh.pop %v483
        %v516 = vtanh.pop %v484
        %v517 = vtanh.pop %v485
        %v518 = vtanh.pop %v486
        %v519 = vtanh.pop %v487
        %v520 = vtanh.pop %v488
        %v521 = vtanh.pop %v489
        %v522 = vtanh.pop %v490
        %v523 = vtanh.pop %v491
        %v524 = vtanh.pop %v492
        %v525 = vtanh.pop %v493
        %v526 = vtanh.pop %v494
        %v527 = vtanh.pop %v495
        %v528 = vtanh.pop %v496
        %v529 = vtanh.pop %v497
        %v530 = vtanh.pop %v498
        %v531 = vtanh.pop %v499
        %v532 = vtanh.pop %v500
        %v533 = vtanh.pop %v501
        %v534 = vtanh.pop %v502
        %v535 = vtanh.pop %v503
        %v536 = vtanh.pop %v504
        %v537 = vtanh.pop %v505
        %v538 = vtanh.pop %v506
        %v539 = vtanh.pop %v507
        %v540 = vtanh.pop %v508
        %541 = vset.pattern.permute.xlu0 8
        %542 = vperm.xlu0 %541, %v241
        %v543 = vpop.permute.xlu0 %542
        %545 = vset.pattern.permute.xlu0 8
        %546 = vperm.xlu0 %545, %v242
        %v547 = vpop.permute.xlu0 %546
        %v549 = vmul.f32 %v509, %v543
        %v550 = vmul.f32 %v510, %v543
        %v551 = vmul.f32 %v511, %v543
        %v552 = vmul.f32 %v512, %v543
        %v553 = vmul.f32 %v513, %v543
        %v554 = vmul.f32 %v514, %v543
        %v555 = vmul.f32 %v515, %v543
        %v556 = vmul.f32 %v516, %v543
        %v557 = vmul.f32 %v517, %v543
        %v558 = vmul.f32 %v518, %v543
        %v559 = vmul.f32 %v519, %v543
        %v560 = vmul.f32 %v520, %v543
        %v561 = vmul.f32 %v521, %v543
        %v562 = vmul.f32 %v522, %v543
        %v563 = vmul.f32 %v523, %v543
        %v564 = vmul.f32 %v524, %v543
        %v565 = vmul.f32 %v525, %v547
        %v566 = vmul.f32 %v526, %v547
        %v567 = vmul.f32 %v527, %v547
        %v568 = vmul.f32 %v528, %v547
        %v569 = vmul.f32 %v529, %v547
        %v570 = vmul.f32 %v530, %v547
        %v571 = vmul.f32 %v531, %v547
        %v572 = vmul.f32 %v532, %v547
        %v573 = vmul.f32 %v533, %v547
        %v574 = vmul.f32 %v534, %v547
        %v575 = vmul.f32 %v535, %v547
        %v576 = vmul.f32 %v536, %v547
        %v577 = vmul.f32 %v537, %v547
        %v578 = vmul.f32 %v538, %v547
        %v579 = vmul.f32 %v539, %v547
        %v580 = vmul.f32 %v540, %v547
        %v581 = vadd.f32 %v477, %v549
        %v582 = vadd.f32 %v478, %v550
        %v583 = vadd.f32 %v479, %v551
        %v584 = vadd.f32 %v480, %v552
        %v585 = vadd.f32 %v481, %v553
        %v586 = vadd.f32 %v482, %v554
        %v587 = vadd.f32 %v483, %v555
        %v588 = vadd.f32 %v484, %v556
        %v589 = vadd.f32 %v485, %v557
        %v590 = vadd.f32 %v486, %v558
        %v591 = vadd.f32 %v487, %v559
        %v592 = vadd.f32 %v488, %v560
        %v593 = vadd.f32 %v489, %v561
        %v594 = vadd.f32 %v490, %v562
        %v595 = vadd.f32 %v491, %v563
        %v596 = vadd.f32 %v492, %v564
        %v597 = vadd.f32 %v493, %v565
        %v598 = vadd.f32 %v494, %v566
        %v599 = vadd.f32 %v495, %v567
        %v600 = vadd.f32 %v496, %v568
        %v601 = vadd.f32 %v497, %v569
        %v602 = vadd.f32 %v498, %v570
        %v603 = vadd.f32 %v499, %v571
        %v604 = vadd.f32 %v500, %v572
        %v605 = vadd.f32 %v501, %v573
        %v606 = vadd.f32 %v502, %v574
        %v607 = vadd.f32 %v503, %v575
        %v608 = vadd.f32 %v504, %v576
        %v609 = vadd.f32 %v505, %v577
        %v610 = vadd.f32 %v506, %v578
        %v611 = vadd.f32 %v507, %v579
        %v612 = vadd.f32 %v508, %v580
        %613 = vset.pattern.permute.xlu0 2
        %614 = vperm.xlu0 %613, %v241
        %v615 = vpop.permute.xlu0 %614
        %617 = vset.pattern.permute.xlu0 2
        %618 = vperm.xlu0 %617, %v242
        %v619 = vpop.permute.xlu0 %618
        %v621 = vmul.f32 %v581, %v615
        %v622 = vmul.f32 %v582, %v615
        %v623 = vmul.f32 %v583, %v615
        %v624 = vmul.f32 %v584, %v615
        %v625 = vmul.f32 %v585, %v615
        %v626 = vmul.f32 %v586, %v615
        %v627 = vmul.f32 %v587, %v615
        %v628 = vmul.f32 %v588, %v615
        %v629 = vmul.f32 %v589, %v615
        %v630 = vmul.f32 %v590, %v615
        %v631 = vmul.f32 %v591, %v615
        %v632 = vmul.f32 %v592, %v615
        %v633 = vmul.f32 %v593, %v615
        %v634 = vmul.f32 %v594, %v615
        %v635 = vmul.f32 %v595, %v615
        %v636 = vmul.f32 %v596, %v615
        %v637 = vmul.f32 %v597, %v619
        %v638 = vmul.f32 %v598, %v619
        %v639 = vmul.f32 %v599, %v619
        %v640 = vmul.f32 %v600, %v619
        %v641 = vmul.f32 %v601, %v619
        %v642 = vmul.f32 %v602, %v619
        %v643 = vmul.f32 %v603, %v619
        %v644 = vmul.f32 %v604, %v619
        %v645 = vmul.f32 %v605, %v619
        %v646 = vmul.f32 %v606, %v619
        %v647 = vmul.f32 %v607, %v619
        %v648 = vmul.f32 %v608, %v619
        %v649 = vmul.f32 %v609, %v619
        %v650 = vmul.f32 %v610, %v619
        %v651 = vmul.f32 %v611, %v619
        %v652 = vmul.f32 %v612, %v619
        %653 = vset.pattern.permute.xlu0 6
        %654 = vperm.xlu0 %653, %v241
        %v655 = vpop.permute.xlu0 %654
        %657 = vset.pattern.permute.xlu0 6
        %658 = vperm.xlu0 %657, %v242
        %v659 = vpop.permute.xlu0 %658
        %v661 = vadd.f32 %v621, %v655
        %v662 = vadd.f32 %v622, %v655
        %v663 = vadd.f32 %v623, %v655
        %v664 = vadd.f32 %v624, %v655
        %v665 = vadd.f32 %v625, %v655
        %v666 = vadd.f32 %v626, %v655
        %v667 = vadd.f32 %v627, %v655
        %v668 = vadd.f32 %v628, %v655
        %v669 = vadd.f32 %v629, %v655
        %v670 = vadd.f32 %v630, %v655
        %v671 = vadd.f32 %v631, %v655
        %v672 = vadd.f32 %v632, %v655
        %v673 = vadd.f32 %v633, %v655
        %v674 = vadd.f32 %v634, %v655
        %v675 = vadd.f32 %v635, %v655
        %v676 = vadd.f32 %v636, %v655
        %v677 = vadd.f32 %v637, %v659
        %v678 = vadd.f32 %v638, %v659
        %v679 = vadd.f32 %v639, %v659
        %v680 = vadd.f32 %v640, %v659
        %v681 = vadd.f32 %v641, %v659
        %v682 = vadd.f32 %v642, %v659
        %v683 = vadd.f32 %v643, %v659
        %v684 = vadd.f32 %v644, %v659
        %v685 = vadd.f32 %v645, %v659
        %v686 = vadd.f32 %v646, %v659
        %v687 = vadd.f32 %v647, %v659
        %v688 = vadd.f32 %v648, %v659
        %v689 = vadd.f32 %v649, %v659
        %v690 = vadd.f32 %v650, %v659
        %v691 = vadd.f32 %v651, %v659
        %v692 = vadd.f32 %v652, %v659
        %v693 = vtanh.pop %v661
        %v694 = vtanh.pop %v662
        %v695 = vtanh.pop %v663
        %v696 = vtanh.pop %v664
        %v697 = vtanh.pop %v665
        %v698 = vtanh.pop %v666
        %v699 = vtanh.pop %v667
        %v700 = vtanh.pop %v668
        %v701 = vtanh.pop %v669
        %v702 = vtanh.pop %v670
        %v703 = vtanh.pop %v671
        %v704 = vtanh.pop %v672
        %v705 = vtanh.pop %v673
        %v706 = vtanh.pop %v674
        %v707 = vtanh.pop %v675
        %v708 = vtanh.pop %v676
        %v709 = vtanh.pop %v677
        %v710 = vtanh.pop %v678
        %v711 = vtanh.pop %v679
        %v712 = vtanh.pop %v680
        %v713 = vtanh.pop %v681
        %v714 = vtanh.pop %v682
        %v715 = vtanh.pop %v683
        %v716 = vtanh.pop %v684
        %v717 = vtanh.pop %v685
        %v718 = vtanh.pop %v686
        %v719 = vtanh.pop %v687
        %v720 = vtanh.pop %v688
        %v721 = vtanh.pop %v689
        %v722 = vtanh.pop %v690
        %v723 = vtanh.pop %v691
        %v724 = vtanh.pop %v692
        %725 = vset.pattern.permute.xlu0 9
        %726 = vperm.xlu0 %725, %v241
        %v727 = vpop.permute.xlu0 %726
        %729 = vset.pattern.permute.xlu0 9
        %730 = vperm.xlu0 %729, %v242
        %v731 = vpop.permute.xlu0 %730
        %v733 = vmul.f32 %v693, %v727
        %v734 = vmul.f32 %v694, %v727
        %v735 = vmul.f32 %v695, %v727
        %v736 = vmul.f32 %v696, %v727
        %v737 = vmul.f32 %v697, %v727
        %v738 = vmul.f32 %v698, %v727
        %v739 = vmul.f32 %v699, %v727
        %v740 = vmul.f32 %v700, %v727
        %v741 = vmul.f32 %v701, %v727
        %v742 = vmul.f32 %v702, %v727
        %v743 = vmul.f32 %v703, %v727
        %v744 = vmul.f32 %v704, %v727
        %v745 = vmul.f32 %v705, %v727
        %v746 = vmul.f32 %v706, %v727
        %v747 = vmul.f32 %v707, %v727
        %v748 = vmul.f32 %v708, %v727
        %v749 = vmul.f32 %v709, %v731
        %v750 = vmul.f32 %v710, %v731
        %v751 = vmul.f32 %v711, %v731
        %v752 = vmul.f32 %v712, %v731
        %v753 = vmul.f32 %v713, %v731
        %v754 = vmul.f32 %v714, %v731
        %v755 = vmul.f32 %v715, %v731
        %v756 = vmul.f32 %v716, %v731
        %v757 = vmul.f32 %v717, %v731
        %v758 = vmul.f32 %v718, %v731
        %v759 = vmul.f32 %v719, %v731
        %v760 = vmul.f32 %v720, %v731
        %v761 = vmul.f32 %v721, %v731
        %v762 = vmul.f32 %v722, %v731
        %v763 = vmul.f32 %v723, %v731
        %v764 = vmul.f32 %v724, %v731
        %v765 = vadd.f32 %v661, %v733
        %v766 = vadd.f32 %v662, %v734
        %v767 = vadd.f32 %v663, %v735
        %v768 = vadd.f32 %v664, %v736
        %v769 = vadd.f32 %v665, %v737
        %v770 = vadd.f32 %v666, %v738
        %v771 = vadd.f32 %v667, %v739
        %v772 = vadd.f32 %v668, %v740
        %v773 = vadd.f32 %v669, %v741
        %v774 = vadd.f32 %v670, %v742
        %v775 = vadd.f32 %v671, %v743
        %v776 = vadd.f32 %v672, %v744
        %v777 = vadd.f32 %v673, %v745
        %v778 = vadd.f32 %v674, %v746
        %v779 = vadd.f32 %v675, %v747
        %v780 = vadd.f32 %v676, %v748
        %v781 = vadd.f32 %v677, %v749
        %v782 = vadd.f32 %v678, %v750
        %v783 = vadd.f32 %v679, %v751
        %v784 = vadd.f32 %v680, %v752
        %v785 = vadd.f32 %v681, %v753
        %v786 = vadd.f32 %v682, %v754
        %v787 = vadd.f32 %v683, %v755
        %v788 = vadd.f32 %v684, %v756
        %v789 = vadd.f32 %v685, %v757
        %v790 = vadd.f32 %v686, %v758
        %v791 = vadd.f32 %v687, %v759
        %v792 = vadd.f32 %v688, %v760
        %v793 = vadd.f32 %v689, %v761
        %v794 = vadd.f32 %v690, %v762
        %v795 = vadd.f32 %v691, %v763
        %v796 = vadd.f32 %v692, %v764
        %797 = vset.pattern.permute.xlu0 10
        %798 = vperm.xlu0 %797, %v241
        %v799 = vpop.permute.xlu0 %798
        %801 = vset.pattern.permute.xlu0 10
        %802 = vperm.xlu0 %801, %v242
        %v803 = vpop.permute.xlu0 %802
        %v805 = vmul.f32 %v765, %v799
        %v806 = vmul.f32 %v766, %v799
        %v807 = vmul.f32 %v767, %v799
        %v808 = vmul.f32 %v768, %v799
        %v809 = vmul.f32 %v769, %v799
        %v810 = vmul.f32 %v770, %v799
        %v811 = vmul.f32 %v771, %v799
        %v812 = vmul.f32 %v772, %v799
        %v813 = vmul.f32 %v773, %v799
        %v814 = vmul.f32 %v774, %v799
        %v815 = vmul.f32 %v775, %v799
        %v816 = vmul.f32 %v776, %v799
        %v817 = vmul.f32 %v777, %v799
        %v818 = vmul.f32 %v778, %v799
        %v819 = vmul.f32 %v779, %v799
        %v820 = vmul.f32 %v780, %v799
        %v821 = vmul.f32 %v781, %v803
        %v822 = vmul.f32 %v782, %v803
        %v823 = vmul.f32 %v783, %v803
        %v824 = vmul.f32 %v784, %v803
        %v825 = vmul.f32 %v785, %v803
        %v826 = vmul.f32 %v786, %v803
        %v827 = vmul.f32 %v787, %v803
        %v828 = vmul.f32 %v788, %v803
        %v829 = vmul.f32 %v789, %v803
        %v830 = vmul.f32 %v790, %v803
        %v831 = vmul.f32 %v791, %v803
        %v832 = vmul.f32 %v792, %v803
        %v833 = vmul.f32 %v793, %v803
        %v834 = vmul.f32 %v794, %v803
        %v835 = vmul.f32 %v795, %v803
        %v836 = vmul.f32 %v796, %v803
        %837 = vset.pattern.permute.xlu0 11
        %838 = vperm.xlu0 %837, %v241
        %v839 = vpop.permute.xlu0 %838
        %841 = vset.pattern.permute.xlu0 11
        %842 = vperm.xlu0 %841, %v242
        %v843 = vpop.permute.xlu0 %842
        %v845 = vadd.f32 %v805, %v839
        %v846 = vadd.f32 %v806, %v839
        %v847 = vadd.f32 %v807, %v839
        %v848 = vadd.f32 %v808, %v839
        %v849 = vadd.f32 %v809, %v839
        %v850 = vadd.f32 %v810, %v839
        %v851 = vadd.f32 %v811, %v839
        %v852 = vadd.f32 %v812, %v839
        %v853 = vadd.f32 %v813, %v839
        %v854 = vadd.f32 %v814, %v839
        %v855 = vadd.f32 %v815, %v839
        %v856 = vadd.f32 %v816, %v839
        %v857 = vadd.f32 %v817, %v839
        %v858 = vadd.f32 %v818, %v839
        %v859 = vadd.f32 %v819, %v839
        %v860 = vadd.f32 %v820, %v839
        %v861 = vadd.f32 %v821, %v843
        %v862 = vadd.f32 %v822, %v843
        %v863 = vadd.f32 %v823, %v843
        %v864 = vadd.f32 %v824, %v843
        %v865 = vadd.f32 %v825, %v843
        %v866 = vadd.f32 %v826, %v843
        %v867 = vadd.f32 %v827, %v843
        %v868 = vadd.f32 %v828, %v843
        %v869 = vadd.f32 %v829, %v843
        %v870 = vadd.f32 %v830, %v843
        %v871 = vadd.f32 %v831, %v843
        %v872 = vadd.f32 %v832, %v843
        %v873 = vadd.f32 %v833, %v843
        %v874 = vadd.f32 %v834, %v843
        %v875 = vadd.f32 %v835, %v843
        %v876 = vadd.f32 %v836, %v843
        %v877 = vtanh.pop %v845
        %v878 = vtanh.pop %v846
        %v879 = vtanh.pop %v847
        %v880 = vtanh.pop %v848
        %v881 = vtanh.pop %v849
        %v882 = vtanh.pop %v850
        %v883 = vtanh.pop %v851
        %v884 = vtanh.pop %v852
        %v885 = vtanh.pop %v853
        %v886 = vtanh.pop %v854
        %v887 = vtanh.pop %v855
        %v888 = vtanh.pop %v856
        %v889 = vtanh.pop %v857
        %v890 = vtanh.pop %v858
        %v891 = vtanh.pop %v859
        %v892 = vtanh.pop %v860
        %v893 = vtanh.pop %v861
        %v894 = vtanh.pop %v862
        %v895 = vtanh.pop %v863
        %v896 = vtanh.pop %v864
        %v897 = vtanh.pop %v865
        %v898 = vtanh.pop %v866
        %v899 = vtanh.pop %v867
        %v900 = vtanh.pop %v868
        %v901 = vtanh.pop %v869
        %v902 = vtanh.pop %v870
        %v903 = vtanh.pop %v871
        %v904 = vtanh.pop %v872
        %v905 = vtanh.pop %v873
        %v906 = vtanh.pop %v874
        %v907 = vtanh.pop %v875
        %v908 = vtanh.pop %v876
        %909 = vset.pattern.permute.xlu0 4
        %910 = vperm.xlu0 %909, %v241
        %v911 = vpop.permute.xlu0 %910
        %913 = vset.pattern.permute.xlu0 4
        %914 = vperm.xlu0 %913, %v242
        %v915 = vpop.permute.xlu0 %914
        %v917 = vadd.f32 %v253, %v911
        %v918 = vadd.f32 %v254, %v911
        %v919 = vadd.f32 %v255, %v911
        %v920 = vadd.f32 %v256, %v911
        %v921 = vadd.f32 %v257, %v911
        %v922 = vadd.f32 %v258, %v911
        %v923 = vadd.f32 %v259, %v911
        %v924 = vadd.f32 %v260, %v911
        %v925 = vadd.f32 %v261, %v911
        %v926 = vadd.f32 %v262, %v911
        %v927 = vadd.f32 %v263, %v911
        %v928 = vadd.f32 %v264, %v911
        %v929 = vadd.f32 %v265, %v911
        %v930 = vadd.f32 %v266, %v911
        %v931 = vadd.f32 %v267, %v911
        %v932 = vadd.f32 %v268, %v911
        %v933 = vadd.f32 %v269, %v915
        %v934 = vadd.f32 %v270, %v915
        %v935 = vadd.f32 %v271, %v915
        %v936 = vadd.f32 %v272, %v915
        %v937 = vadd.f32 %v273, %v915
        %v938 = vadd.f32 %v274, %v915
        %v939 = vadd.f32 %v275, %v915
        %v940 = vadd.f32 %v276, %v915
        %v941 = vadd.f32 %v277, %v915
        %v942 = vadd.f32 %v278, %v915
        %v943 = vadd.f32 %v279, %v915
        %v944 = vadd.f32 %v280, %v915
        %v945 = vadd.f32 %v281, %v915
        %v946 = vadd.f32 %v282, %v915
        %v947 = vadd.f32 %v283, %v915
        %v948 = vadd.f32 %v284, %v915
        %v949 = vtanh.pop %v917
        %v950 = vtanh.pop %v918
        %v951 = vtanh.pop %v919
        %v952 = vtanh.pop %v920
        %v953 = vtanh.pop %v921
        %v954 = vtanh.pop %v922
        %v955 = vtanh.pop %v923
        %v956 = vtanh.pop %v924
        %v957 = vtanh.pop %v925
        %v958 = vtanh.pop %v926
        %v959 = vtanh.pop %v927
        %v960 = vtanh.pop %v928
        %v961 = vtanh.pop %v929
        %v962 = vtanh.pop %v930
        %v963 = vtanh.pop %v931
        %v964 = vtanh.pop %v932
        %v965 = vtanh.pop %v933
        %v966 = vtanh.pop %v934
        %v967 = vtanh.pop %v935
        %v968 = vtanh.pop %v936
        %v969 = vtanh.pop %v937
        %v970 = vtanh.pop %v938
        %v971 = vtanh.pop %v939
        %v972 = vtanh.pop %v940
        %v973 = vtanh.pop %v941
        %v974 = vtanh.pop %v942
        %v975 = vtanh.pop %v943
        %v976 = vtanh.pop %v944
        %v977 = vtanh.pop %v945
        %v978 = vtanh.pop %v946
        %v979 = vtanh.pop %v947
        %v980 = vtanh.pop %v948
        %v981 = vmul.f32 %v949, %v359
        %v982 = vmul.f32 %v950, %v359
        %v983 = vmul.f32 %v951, %v359
        %v984 = vmul.f32 %v952, %v359
        %v985 = vmul.f32 %v953, %v359
        %v986 = vmul.f32 %v954, %v359
        %v987 = vmul.f32 %v955, %v359
        %v988 = vmul.f32 %v956, %v359
        %v989 = vmul.f32 %v957, %v359
        %v990 = vmul.f32 %v958, %v359
        %v991 = vmul.f32 %v959, %v359
        %v992 = vmul.f32 %v960, %v359
        %v993 = vmul.f32 %v961, %v359
        %v994 = vmul.f32 %v962, %v359
        %v995 = vmul.f32 %v963, %v359
        %v996 = vmul.f32 %v964, %v359
        %v997 = vmul.f32 %v965, %v363
        %v998 = vmul.f32 %v966, %v363
        %v999 = vmul.f32 %v967, %v363
        %v1000 = vmul.f32 %v968, %v363
        %v1001 = vmul.f32 %v969, %v363
        %v1002 = vmul.f32 %v970, %v363
        %v1003 = vmul.f32 %v971, %v363
        %v1004 = vmul.f32 %v972, %v363
        %v1005 = vmul.f32 %v973, %v363
        %v1006 = vmul.f32 %v974, %v363
        %v1007 = vmul.f32 %v975, %v363
        %v1008 = vmul.f32 %v976, %v363
        %v1009 = vmul.f32 %v977, %v363
        %v1010 = vmul.f32 %v978, %v363
        %v1011 = vmul.f32 %v979, %v363
        %v1012 = vmul.f32 %v980, %v363
        %v1013 = vadd.f32 %v917, %v981
        %v1014 = vadd.f32 %v918, %v982
        %v1015 = vadd.f32 %v919, %v983
        %v1016 = vadd.f32 %v920, %v984
        %v1017 = vadd.f32 %v921, %v985
        %v1018 = vadd.f32 %v922, %v986
        %v1019 = vadd.f32 %v923, %v987
        %v1020 = vadd.f32 %v924, %v988
        %v1021 = vadd.f32 %v925, %v989
        %v1022 = vadd.f32 %v926, %v990
        %v1023 = vadd.f32 %v927, %v991
        %v1024 = vadd.f32 %v928, %v992
        %v1025 = vadd.f32 %v929, %v993
        %v1026 = vadd.f32 %v930, %v994
        %v1027 = vadd.f32 %v931, %v995
        %v1028 = vadd.f32 %v932, %v996
        %v1029 = vadd.f32 %v933, %v997
        %v1030 = vadd.f32 %v934, %v998
        %v1031 = vadd.f32 %v935, %v999
        %v1032 = vadd.f32 %v936, %v1000
        %v1033 = vadd.f32 %v937, %v1001
        %v1034 = vadd.f32 %v938, %v1002
        %v1035 = vadd.f32 %v939, %v1003
        %v1036 = vadd.f32 %v940, %v1004
        %v1037 = vadd.f32 %v941, %v1005
        %v1038 = vadd.f32 %v942, %v1006
        %v1039 = vadd.f32 %v943, %v1007
        %v1040 = vadd.f32 %v944, %v1008
        %v1041 = vadd.f32 %v945, %v1009
        %v1042 = vadd.f32 %v946, %v1010
        %v1043 = vadd.f32 %v947, %v1011
        %v1044 = vadd.f32 %v948, %v1012
        %v1045 = vmul.f32 %v1013, %v431
        %v1046 = vmul.f32 %v1014, %v431
        %v1047 = vmul.f32 %v1015, %v431
        %v1048 = vmul.f32 %v1016, %v431
        %v1049 = vmul.f32 %v1017, %v431
        %v1050 = vmul.f32 %v1018, %v431
        %v1051 = vmul.f32 %v1019, %v431
        %v1052 = vmul.f32 %v1020, %v431
        %v1053 = vmul.f32 %v1021, %v431
        %v1054 = vmul.f32 %v1022, %v431
        %v1055 = vmul.f32 %v1023, %v431
        %v1056 = vmul.f32 %v1024, %v431
        %v1057 = vmul.f32 %v1025, %v431
        %v1058 = vmul.f32 %v1026, %v431
        %v1059 = vmul.f32 %v1027, %v431
        %v1060 = vmul.f32 %v1028, %v431
        %v1061 = vmul.f32 %v1029, %v435
        %v1062 = vmul.f32 %v1030, %v435
        %v1063 = vmul.f32 %v1031, %v435
        %v1064 = vmul.f32 %v1032, %v435
        %v1065 = vmul.f32 %v1033, %v435
        %v1066 = vmul.f32 %v1034, %v435
        %v1067 = vmul.f32 %v1035, %v435
        %v1068 = vmul.f32 %v1036, %v435
        %v1069 = vmul.f32 %v1037, %v435
        %v1070 = vmul.f32 %v1038, %v435
        %v1071 = vmul.f32 %v1039, %v435
        %v1072 = vmul.f32 %v1040, %v435
        %v1073 = vmul.f32 %v1041, %v435
        %v1074 = vmul.f32 %v1042, %v435
        %v1075 = vmul.f32 %v1043, %v435
        %v1076 = vmul.f32 %v1044, %v435
        %v1077 = vadd.f32 %v1045, %v471
        %v1078 = vadd.f32 %v1046, %v471
        %v1079 = vadd.f32 %v1047, %v471
        %v1080 = vadd.f32 %v1048, %v471
        %v1081 = vadd.f32 %v1049, %v471
        %v1082 = vadd.f32 %v1050, %v471
        %v1083 = vadd.f32 %v1051, %v471
        %v1084 = vadd.f32 %v1052, %v471
        %v1085 = vadd.f32 %v1053, %v471
        %v1086 = vadd.f32 %v1054, %v471
        %v1087 = vadd.f32 %v1055, %v471
        %v1088 = vadd.f32 %v1056, %v471
        %v1089 = vadd.f32 %v1057, %v471
        %v1090 = vadd.f32 %v1058, %v471
        %v1091 = vadd.f32 %v1059, %v471
        %v1092 = vadd.f32 %v1060, %v471
        %v1093 = vadd.f32 %v1061, %v475
        %v1094 = vadd.f32 %v1062, %v475
        %v1095 = vadd.f32 %v1063, %v475
        %v1096 = vadd.f32 %v1064, %v475
        %v1097 = vadd.f32 %v1065, %v475
        %v1098 = vadd.f32 %v1066, %v475
        %v1099 = vadd.f32 %v1067, %v475
        %v1100 = vadd.f32 %v1068, %v475
        %v1101 = vadd.f32 %v1069, %v475
        %v1102 = vadd.f32 %v1070, %v475
        %v1103 = vadd.f32 %v1071, %v475
        %v1104 = vadd.f32 %v1072, %v475
        %v1105 = vadd.f32 %v1073, %v475
        %v1106 = vadd.f32 %v1074, %v475
        %v1107 = vadd.f32 %v1075, %v475
        %v1108 = vadd.f32 %v1076, %v475
        %v1109 = vtanh.pop %v1077
        %v1110 = vtanh.pop %v1078
        %v1111 = vtanh.pop %v1079
        %v1112 = vtanh.pop %v1080
        %v1113 = vtanh.pop %v1081
        %v1114 = vtanh.pop %v1082
        %v1115 = vtanh.pop %v1083
        %v1116 = vtanh.pop %v1084
        %v1117 = vtanh.pop %v1085
        %v1118 = vtanh.pop %v1086
        %v1119 = vtanh.pop %v1087
        %v1120 = vtanh.pop %v1088
        %v1121 = vtanh.pop %v1089
        %v1122 = vtanh.pop %v1090
        %v1123 = vtanh.pop %v1091
        %v1124 = vtanh.pop %v1092
        %v1125 = vtanh.pop %v1093
        %v1126 = vtanh.pop %v1094
        %v1127 = vtanh.pop %v1095
        %v1128 = vtanh.pop %v1096
        %v1129 = vtanh.pop %v1097
        %v1130 = vtanh.pop %v1098
        %v1131 = vtanh.pop %v1099
        %v1132 = vtanh.pop %v1100
        %v1133 = vtanh.pop %v1101
        %v1134 = vtanh.pop %v1102
        %v1135 = vtanh.pop %v1103
        %v1136 = vtanh.pop %v1104
        %v1137 = vtanh.pop %v1105
        %v1138 = vtanh.pop %v1106
        %v1139 = vtanh.pop %v1107
        %v1140 = vtanh.pop %v1108
        %v1141 = vmul.f32 %v1109, %v543
        %v1142 = vmul.f32 %v1110, %v543
        %v1143 = vmul.f32 %v1111, %v543
        %v1144 = vmul.f32 %v1112, %v543
        %v1145 = vmul.f32 %v1113, %v543
        %v1146 = vmul.f32 %v1114, %v543
        %v1147 = vmul.f32 %v1115, %v543
        %v1148 = vmul.f32 %v1116, %v543
        %v1149 = vmul.f32 %v1117, %v543
        %v1150 = vmul.f32 %v1118, %v543
        %v1151 = vmul.f32 %v1119, %v543
        %v1152 = vmul.f32 %v1120, %v543
        %v1153 = vmul.f32 %v1121, %v543
        %v1154 = vmul.f32 %v1122, %v543
        %v1155 = vmul.f32 %v1123, %v543
        %v1156 = vmul.f32 %v1124, %v543
        %v1157 = vmul.f32 %v1125, %v547
        %v1158 = vmul.f32 %v1126, %v547
        %v1159 = vmul.f32 %v1127, %v547
        %v1160 = vmul.f32 %v1128, %v547
        %v1161 = vmul.f32 %v1129, %v547
        %v1162 = vmul.f32 %v1130, %v547
        %v1163 = vmul.f32 %v1131, %v547
        %v1164 = vmul.f32 %v1132, %v547
        %v1165 = vmul.f32 %v1133, %v547
        %v1166 = vmul.f32 %v1134, %v547
        %v1167 = vmul.f32 %v1135, %v547
        %v1168 = vmul.f32 %v1136, %v547
        %v1169 = vmul.f32 %v1137, %v547
        %v1170 = vmul.f32 %v1138, %v547
        %v1171 = vmul.f32 %v1139, %v547
        %v1172 = vmul.f32 %v1140, %v547
        %v1173 = vadd.f32 %v1077, %v1141
        %v1174 = vadd.f32 %v1078, %v1142
        %v1175 = vadd.f32 %v1079, %v1143
        %v1176 = vadd.f32 %v1080, %v1144
        %v1177 = vadd.f32 %v1081, %v1145
        %v1178 = vadd.f32 %v1082, %v1146
        %v1179 = vadd.f32 %v1083, %v1147
        %v1180 = vadd.f32 %v1084, %v1148
        %v1181 = vadd.f32 %v1085, %v1149
        %v1182 = vadd.f32 %v1086, %v1150
        %v1183 = vadd.f32 %v1087, %v1151
        %v1184 = vadd.f32 %v1088, %v1152
        %v1185 = vadd.f32 %v1089, %v1153
        %v1186 = vadd.f32 %v1090, %v1154
        %v1187 = vadd.f32 %v1091, %v1155
        %v1188 = vadd.f32 %v1092, %v1156
        %v1189 = vadd.f32 %v1093, %v1157
        %v1190 = vadd.f32 %v1094, %v1158
        %v1191 = vadd.f32 %v1095, %v1159
        %v1192 = vadd.f32 %v1096, %v1160
        %v1193 = vadd.f32 %v1097, %v1161
        %v1194 = vadd.f32 %v1098, %v1162
        %v1195 = vadd.f32 %v1099, %v1163
        %v1196 = vadd.f32 %v1100, %v1164
        %v1197 = vadd.f32 %v1101, %v1165
        %v1198 = vadd.f32 %v1102, %v1166
        %v1199 = vadd.f32 %v1103, %v1167
        %v1200 = vadd.f32 %v1104, %v1168
        %v1201 = vadd.f32 %v1105, %v1169
        %v1202 = vadd.f32 %v1106, %v1170
        %v1203 = vadd.f32 %v1107, %v1171
        %v1204 = vadd.f32 %v1108, %v1172
        %v1205 = vmul.f32 %v1173, %v615
        %v1206 = vmul.f32 %v1174, %v615
        %v1207 = vmul.f32 %v1175, %v615
        %v1208 = vmul.f32 %v1176, %v615
        %v1209 = vmul.f32 %v1177, %v615
        %v1210 = vmul.f32 %v1178, %v615
        %v1211 = vmul.f32 %v1179, %v615
        %v1212 = vmul.f32 %v1180, %v615
        %v1213 = vmul.f32 %v1181, %v615
        %v1214 = vmul.f32 %v1182, %v615
        %v1215 = vmul.f32 %v1183, %v615
        %v1216 = vmul.f32 %v1184, %v615
        %v1217 = vmul.f32 %v1185, %v615
        %v1218 = vmul.f32 %v1186, %v615
        %v1219 = vmul.f32 %v1187, %v615
        %v1220 = vmul.f32 %v1188, %v615
        %v1221 = vmul.f32 %v1189, %v619
        %v1222 = vmul.f32 %v1190, %v619
        %v1223 = vmul.f32 %v1191, %v619
        %v1224 = vmul.f32 %v1192, %v619
        %v1225 = vmul.f32 %v1193, %v619
        %v1226 = vmul.f32 %v1194, %v619
        %v1227 = vmul.f32 %v1195, %v619
        %v1228 = vmul.f32 %v1196, %v619
        %v1229 = vmul.f32 %v1197, %v619
        %v1230 = vmul.f32 %v1198, %v619
        %v1231 = vmul.f32 %v1199, %v619
        %v1232 = vmul.f32 %v1200, %v619
        %v1233 = vmul.f32 %v1201, %v619
        %v1234 = vmul.f32 %v1202, %v619
        %v1235 = vmul.f32 %v1203, %v619
        %v1236 = vmul.f32 %v1204, %v619
        %v1237 = vadd.f32 %v1205, %v655
        %v1238 = vadd.f32 %v1206, %v655
        %v1239 = vadd.f32 %v1207, %v655
        %v1240 = vadd.f32 %v1208, %v655
        %v1241 = vadd.f32 %v1209, %v655
        %v1242 = vadd.f32 %v1210, %v655
        %v1243 = vadd.f32 %v1211, %v655
        %v1244 = vadd.f32 %v1212, %v655
        %v1245 = vadd.f32 %v1213, %v655
        %v1246 = vadd.f32 %v1214, %v655
        %v1247 = vadd.f32 %v1215, %v655
        %v1248 = vadd.f32 %v1216, %v655
        %v1249 = vadd.f32 %v1217, %v655
        %v1250 = vadd.f32 %v1218, %v655
        %v1251 = vadd.f32 %v1219, %v655
        %v1252 = vadd.f32 %v1220, %v655
        %v1253 = vadd.f32 %v1221, %v659
        %v1254 = vadd.f32 %v1222, %v659
        %v1255 = vadd.f32 %v1223, %v659
        %v1256 = vadd.f32 %v1224, %v659
        %v1257 = vadd.f32 %v1225, %v659
        %v1258 = vadd.f32 %v1226, %v659
        %v1259 = vadd.f32 %v1227, %v659
        %v1260 = vadd.f32 %v1228, %v659
        %v1261 = vadd.f32 %v1229, %v659
        %v1262 = vadd.f32 %v1230, %v659
        %v1263 = vadd.f32 %v1231, %v659
        %v1264 = vadd.f32 %v1232, %v659
        %v1265 = vadd.f32 %v1233, %v659
        %v1266 = vadd.f32 %v1234, %v659
        %v1267 = vadd.f32 %v1235, %v659
        %v1268 = vadd.f32 %v1236, %v659
        %v1269 = vtanh.pop %v1237
        %v1270 = vtanh.pop %v1238
        %v1271 = vtanh.pop %v1239
        %v1272 = vtanh.pop %v1240
        %v1273 = vtanh.pop %v1241
        %v1274 = vtanh.pop %v1242
        %v1275 = vtanh.pop %v1243
        %v1276 = vtanh.pop %v1244
        %v1277 = vtanh.pop %v1245
        %v1278 = vtanh.pop %v1246
        %v1279 = vtanh.pop %v1247
        %v1280 = vtanh.pop %v1248
        %v1281 = vtanh.pop %v1249
        %v1282 = vtanh.pop %v1250
        %v1283 = vtanh.pop %v1251
        %v1284 = vtanh.pop %v1252
        %v1285 = vtanh.pop %v1253
        %v1286 = vtanh.pop %v1254
        %v1287 = vtanh.pop %v1255
        %v1288 = vtanh.pop %v1256
        %v1289 = vtanh.pop %v1257
        %v1290 = vtanh.pop %v1258
        %v1291 = vtanh.pop %v1259
        %v1292 = vtanh.pop %v1260
        %v1293 = vtanh.pop %v1261
        %v1294 = vtanh.pop %v1262
        %v1295 = vtanh.pop %v1263
        %v1296 = vtanh.pop %v1264
        %v1297 = vtanh.pop %v1265
        %v1298 = vtanh.pop %v1266
        %v1299 = vtanh.pop %v1267
        %v1300 = vtanh.pop %v1268
        %v1301 = vmul.f32 %v1269, %v727
        %v1302 = vmul.f32 %v1270, %v727
        %v1303 = vmul.f32 %v1271, %v727
        %v1304 = vmul.f32 %v1272, %v727
        %v1305 = vmul.f32 %v1273, %v727
        %v1306 = vmul.f32 %v1274, %v727
        %v1307 = vmul.f32 %v1275, %v727
        %v1308 = vmul.f32 %v1276, %v727
        %v1309 = vmul.f32 %v1277, %v727
        %v1310 = vmul.f32 %v1278, %v727
        %v1311 = vmul.f32 %v1279, %v727
        %v1312 = vmul.f32 %v1280, %v727
        %v1313 = vmul.f32 %v1281, %v727
        %v1314 = vmul.f32 %v1282, %v727
        %v1315 = vmul.f32 %v1283, %v727
        %v1316 = vmul.f32 %v1284, %v727
        %v1317 = vmul.f32 %v1285, %v731
        %v1318 = vmul.f32 %v1286, %v731
        %v1319 = vmul.f32 %v1287, %v731
        %v1320 = vmul.f32 %v1288, %v731
        %v1321 = vmul.f32 %v1289, %v731
        %v1322 = vmul.f32 %v1290, %v731
        %v1323 = vmul.f32 %v1291, %v731
        %v1324 = vmul.f32 %v1292, %v731
        %v1325 = vmul.f32 %v1293, %v731
        %v1326 = vmul.f32 %v1294, %v731
        %v1327 = vmul.f32 %v1295, %v731
        %v1328 = vmul.f32 %v1296, %v731
        %v1329 = vmul.f32 %v1297, %v731
        %v1330 = vmul.f32 %v1298, %v731
        %v1331 = vmul.f32 %v1299, %v731
        %v1332 = vmul.f32 %v1300, %v731
        %v1333 = vadd.f32 %v1237, %v1301
        %v1334 = vadd.f32 %v1238, %v1302
        %v1335 = vadd.f32 %v1239, %v1303
        %v1336 = vadd.f32 %v1240, %v1304
        %v1337 = vadd.f32 %v1241, %v1305
        %v1338 = vadd.f32 %v1242, %v1306
        %v1339 = vadd.f32 %v1243, %v1307
        %v1340 = vadd.f32 %v1244, %v1308
        %v1341 = vadd.f32 %v1245, %v1309
        %v1342 = vadd.f32 %v1246, %v1310
        %v1343 = vadd.f32 %v1247, %v1311
        %v1344 = vadd.f32 %v1248, %v1312
        %v1345 = vadd.f32 %v1249, %v1313
        %v1346 = vadd.f32 %v1250, %v1314
        %v1347 = vadd.f32 %v1251, %v1315
        %v1348 = vadd.f32 %v1252, %v1316
        %v1349 = vadd.f32 %v1253, %v1317
        %v1350 = vadd.f32 %v1254, %v1318
        %v1351 = vadd.f32 %v1255, %v1319
        %v1352 = vadd.f32 %v1256, %v1320
        %v1353 = vadd.f32 %v1257, %v1321
        %v1354 = vadd.f32 %v1258, %v1322
        %v1355 = vadd.f32 %v1259, %v1323
        %v1356 = vadd.f32 %v1260, %v1324
        %v1357 = vadd.f32 %v1261, %v1325
        %v1358 = vadd.f32 %v1262, %v1326
        %v1359 = vadd.f32 %v1263, %v1327
        %v1360 = vadd.f32 %v1264, %v1328
        %v1361 = vadd.f32 %v1265, %v1329
        %v1362 = vadd.f32 %v1266, %v1330
        %v1363 = vadd.f32 %v1267, %v1331
        %v1364 = vadd.f32 %v1268, %v1332
        %v1365 = vmul.f32 %v1333, %v799
        %v1366 = vmul.f32 %v1334, %v799
        %v1367 = vmul.f32 %v1335, %v799
        %v1368 = vmul.f32 %v1336, %v799
        %v1369 = vmul.f32 %v1337, %v799
        %v1370 = vmul.f32 %v1338, %v799
        %v1371 = vmul.f32 %v1339, %v799
        %v1372 = vmul.f32 %v1340, %v799
        %v1373 = vmul.f32 %v1341, %v799
        %v1374 = vmul.f32 %v1342, %v799
        %v1375 = vmul.f32 %v1343, %v799
        %v1376 = vmul.f32 %v1344, %v799
        %v1377 = vmul.f32 %v1345, %v799
        %v1378 = vmul.f32 %v1346, %v799
        %v1379 = vmul.f32 %v1347, %v799
        %v1380 = vmul.f32 %v1348, %v799
        %v1381 = vmul.f32 %v1349, %v803
        %v1382 = vmul.f32 %v1350, %v803
        %v1383 = vmul.f32 %v1351, %v803
        %v1384 = vmul.f32 %v1352, %v803
        %v1385 = vmul.f32 %v1353, %v803
        %v1386 = vmul.f32 %v1354, %v803
        %v1387 = vmul.f32 %v1355, %v803
        %v1388 = vmul.f32 %v1356, %v803
        %v1389 = vmul.f32 %v1357, %v803
        %v1390 = vmul.f32 %v1358, %v803
        %v1391 = vmul.f32 %v1359, %v803
        %v1392 = vmul.f32 %v1360, %v803
        %v1393 = vmul.f32 %v1361, %v803
        %v1394 = vmul.f32 %v1362, %v803
        %v1395 = vmul.f32 %v1363, %v803
        %v1396 = vmul.f32 %v1364, %v803
        %v1397 = vadd.f32 %v1365, %v839
        %v1398 = vadd.f32 %v1366, %v839
        %v1399 = vadd.f32 %v1367, %v839
        %v1400 = vadd.f32 %v1368, %v839
        %v1401 = vadd.f32 %v1369, %v839
        %v1402 = vadd.f32 %v1370, %v839
        %v1403 = vadd.f32 %v1371, %v839
        %v1404 = vadd.f32 %v1372, %v839
        %v1405 = vadd.f32 %v1373, %v839
        %v1406 = vadd.f32 %v1374, %v839
        %v1407 = vadd.f32 %v1375, %v839
        %v1408 = vadd.f32 %v1376, %v839
        %v1409 = vadd.f32 %v1377, %v839
        %v1410 = vadd.f32 %v1378, %v839
        %v1411 = vadd.f32 %v1379, %v839
        %v1412 = vadd.f32 %v1380, %v839
        %v1413 = vadd.f32 %v1381, %v843
        %v1414 = vadd.f32 %v1382, %v843
        %v1415 = vadd.f32 %v1383, %v843
        %v1416 = vadd.f32 %v1384, %v843
        %v1417 = vadd.f32 %v1385, %v843
        %v1418 = vadd.f32 %v1386, %v843
        %v1419 = vadd.f32 %v1387, %v843
        %v1420 = vadd.f32 %v1388, %v843
        %v1421 = vadd.f32 %v1389, %v843
        %v1422 = vadd.f32 %v1390, %v843
        %v1423 = vadd.f32 %v1391, %v843
        %v1424 = vadd.f32 %v1392, %v843
        %v1425 = vadd.f32 %v1393, %v843
        %v1426 = vadd.f32 %v1394, %v843
        %v1427 = vadd.f32 %v1395, %v843
        %v1428 = vadd.f32 %v1396, %v843
        %v1429 = vtanh.pop %v1397
        %v1430 = vtanh.pop %v1398
        %v1431 = vtanh.pop %v1399
        %v1432 = vtanh.pop %v1400
        %v1433 = vtanh.pop %v1401
        %v1434 = vtanh.pop %v1402
        %v1435 = vtanh.pop %v1403
        %v1436 = vtanh.pop %v1404
        %v1437 = vtanh.pop %v1405
        %v1438 = vtanh.pop %v1406
        %v1439 = vtanh.pop %v1407
        %v1440 = vtanh.pop %v1408
        %v1441 = vtanh.pop %v1409
        %v1442 = vtanh.pop %v1410
        %v1443 = vtanh.pop %v1411
        %v1444 = vtanh.pop %v1412
        %v1445 = vtanh.pop %v1413
        %v1446 = vtanh.pop %v1414
        %v1447 = vtanh.pop %v1415
        %v1448 = vtanh.pop %v1416
        %v1449 = vtanh.pop %v1417
        %v1450 = vtanh.pop %v1418
        %v1451 = vtanh.pop %v1419
        %v1452 = vtanh.pop %v1420
        %v1453 = vtanh.pop %v1421
        %v1454 = vtanh.pop %v1422
        %v1455 = vtanh.pop %v1423
        %v1456 = vtanh.pop %v1424
        %v1457 = vtanh.pop %v1425
        %v1458 = vtanh.pop %v1426
        %v1459 = vtanh.pop %v1427
        %v1460 = vtanh.pop %v1428
        %v1461 = vsub.f32 %v877, %v1429
        %v1462 = vsub.f32 %v878, %v1430
        %v1463 = vsub.f32 %v879, %v1431
        %v1464 = vsub.f32 %v880, %v1432
        %v1465 = vsub.f32 %v881, %v1433
        %v1466 = vsub.f32 %v882, %v1434
        %v1467 = vsub.f32 %v883, %v1435
        %v1468 = vsub.f32 %v884, %v1436
        %v1469 = vsub.f32 %v885, %v1437
        %v1470 = vsub.f32 %v886, %v1438
        %v1471 = vsub.f32 %v887, %v1439
        %v1472 = vsub.f32 %v888, %v1440
        %v1473 = vsub.f32 %v889, %v1441
        %v1474 = vsub.f32 %v890, %v1442
        %v1475 = vsub.f32 %v891, %v1443
        %v1476 = vsub.f32 %v892, %v1444
        %v1477 = vsub.f32 %v893, %v1445
        %v1478 = vsub.f32 %v894, %v1446
        %v1479 = vsub.f32 %v895, %v1447
        %v1480 = vsub.f32 %v896, %v1448
        %v1481 = vsub.f32 %v897, %v1449
        %v1482 = vsub.f32 %v898, %v1450
        %v1483 = vsub.f32 %v899, %v1451
        %v1484 = vsub.f32 %v900, %v1452
        %v1485 = vsub.f32 %v901, %v1453
        %v1486 = vsub.f32 %v902, %v1454
        %v1487 = vsub.f32 %v903, %v1455
        %v1488 = vsub.f32 %v904, %v1456
        %v1489 = vsub.f32 %v905, %v1457
        %v1490 = vsub.f32 %v906, %v1458
        %v1491 = vsub.f32 %v907, %v1459
        %v1492 = vsub.f32 %v908, %v1460
        %v1493 = vmul.f32 %v1461, 0.5
        %v1494 = vmul.f32 %v1462, 0.5
        %v1495 = vmul.f32 %v1463, 0.5
        %v1496 = vmul.f32 %v1464, 0.5
        %v1497 = vmul.f32 %v1465, 0.5
        %v1498 = vmul.f32 %v1466, 0.5
        %v1499 = vmul.f32 %v1467, 0.5
        %v1500 = vmul.f32 %v1468, 0.5
        %v1501 = vmul.f32 %v1469, 0.5
        %v1502 = vmul.f32 %v1470, 0.5
        %v1503 = vmul.f32 %v1471, 0.5
        %v1504 = vmul.f32 %v1472, 0.5
        %v1505 = vmul.f32 %v1473, 0.5
        %v1506 = vmul.f32 %v1474, 0.5
        %v1507 = vmul.f32 %v1475, 0.5
        %v1508 = vmul.f32 %v1476, 0.5
        %v1509 = vmul.f32 %v1477, 0.5
        %v1510 = vmul.f32 %v1478, 0.5
        %v1511 = vmul.f32 %v1479, 0.5
        %v1512 = vmul.f32 %v1480, 0.5
        %v1513 = vmul.f32 %v1481, 0.5
        %v1514 = vmul.f32 %v1482, 0.5
        %v1515 = vmul.f32 %v1483, 0.5
        %v1516 = vmul.f32 %v1484, 0.5
        %v1517 = vmul.f32 %v1485, 0.5
        %v1518 = vmul.f32 %v1486, 0.5
        %v1519 = vmul.f32 %v1487, 0.5
        %v1520 = vmul.f32 %v1488, 0.5
        %v1521 = vmul.f32 %v1489, 0.5
        %v1522 = vmul.f32 %v1490, 0.5
        %v1523 = vmul.f32 %v1491, 0.5
        %v1524 = vmul.f32 %v1492, 0.5
        %1525 = vst [vmem:[%s203] sm:$0xff] %v1493
        %1526 = vst [vmem:[%s203 + $0x8] sm:$0xff] %v1494
        %1527 = vst [vmem:[%s203 + $0x10] sm:$0xff] %v1495
        %1528 = vst [vmem:[%s203 + $0x18] sm:$0xff] %v1496
        %1529 = vst [vmem:[%s203 + $0x20] sm:$0xff] %v1497
        %1530 = vst [vmem:[%s203 + $0x28] sm:$0xff] %v1498
        %1531 = vst [vmem:[%s203 + $0x30] sm:$0xff] %v1499
        %1532 = vst [vmem:[%s203 + $0x38] sm:$0xff] %v1500
        %1533 = vst [vmem:[%s203 + $0x40] sm:$0xff] %v1501
        %1534 = vst [vmem:[%s203 + $0x48] sm:$0xff] %v1502
        %1535 = vst [vmem:[%s203 + $0x50] sm:$0xff] %v1503
        %1536 = vst [vmem:[%s203 + $0x58] sm:$0xff] %v1504
        %1537 = vst [vmem:[%s203 + $0x60] sm:$0xff] %v1505
        %1538 = vst [vmem:[%s203 + $0x68] sm:$0xff] %v1506
        %1539 = vst [vmem:[%s203 + $0x70] sm:$0xff] %v1507
        %1540 = vst [vmem:[%s203 + $0x78] sm:$0xff] %v1508
        %1541 = vst [vmem:[%s203 + $0x80] sm:$0xff] %v1509
        %1542 = vst [vmem:[%s203 + $0x88] sm:$0xff] %v1510
        %1543 = vst [vmem:[%s203 + $0x90] sm:$0xff] %v1511
        %1544 = vst [vmem:[%s203 + $0x98] sm:$0xff] %v1512
        %1545 = vst [vmem:[%s203 + $0xa0] sm:$0xff] %v1513
        %1546 = vst [vmem:[%s203 + $0xa8] sm:$0xff] %v1514
        %1547 = vst [vmem:[%s203 + $0xb0] sm:$0xff] %v1515
        %1548 = vst [vmem:[%s203 + $0xb8] sm:$0xff] %v1516
        %1549 = vst [vmem:[%s203 + $0xc0] sm:$0xff] %v1517
        %1550 = vst [vmem:[%s203 + $0xc8] sm:$0xff] %v1518
        %1551 = vst [vmem:[%s203 + $0xd0] sm:$0xff] %v1519
        %1552 = vst [vmem:[%s203 + $0xd8] sm:$0xff] %v1520
        %1553 = vst [vmem:[%s203 + $0xe0] sm:$0xff] %v1521
        %1554 = vst [vmem:[%s203 + $0xe8] sm:$0xff] %v1522
        %1555 = vst [vmem:[%s203 + $0xf0] sm:$0xff] %v1523
        %1556 = vst [vmem:[%s203 + $0xf8] sm:$0xff] %v1524
        %s1557 = sand.u32 %s96, 1
        %s1558 = scalar_lea.sflag [#allocation4], %s1557
        %s1559 = sand.u32 %s96, 1
        %s1560 = smul.addr %s1559, 256
        %s1561 = scalar_lea.vmem [#allocation7], %s1560
        // Predicated region
        $region37: #{tpu_custom_call.1} parent=27 // pred_check
          %p1562 = pneg %p106
        $region38: #{tpu_custom_call.1} parent=27 // pred_check_branch
          %1564 = sbr.rel (%p1562) target = $region40
        $region39: #{tpu_custom_call.1} parent=27 // pred_region
          %s1565 = smul.u32 2, %s24
          %s1566 = smul.u32 16, %s25
          %s1568 = ssub.s32 4096, 4096
          %1569 = vsyncadd %s1558, %s1568
          %s1570 = smul.addr %s1565, 32
          %s1571 = sadd.s32 %s1566, %s1570
          %s1572 = smul.addr %s1571, 128
          %s1573 = scalar_lea.hbm %s2, %s1572
          %s1574 = sshll.u32 %s1561, 4
          %s1575 = int_to_ptr.vmem [resolvable:$true] %s1574
          %1580 = dma.vmem_to_hbm [thread:$0]  %s1575, 4096, %s1573, %s1558, 2048, 4096, 128
        $region40: #{tpu_custom_call.1} parent=27 // pred_fallthru
          _
      $region28: #{tpu_custom_call.1} parent=5 // pred_fallthru
        _
      %p1581 = scmp.le.s32.totalorder 2, %s15
      // Predicated region
      $region41: #{tpu_custom_call.1} parent=5 // pred_check
        %p1582 = pneg %p1581
      $region42: #{tpu_custom_call.1} parent=5 // pred_check_branch
        %1584 = sbr.rel (%p1582) target = $region44
      $region43: #{tpu_custom_call.1} parent=5 // pred_region
        %s1585 = ssub.s32 %s15, 2
        // Predicated region
        $region45: #{tpu_custom_call.1} parent=43 // pred_check
          %p1586 = pneg %p112
        $region46: #{tpu_custom_call.1} parent=43 // pred_check_branch
          %1588 = sbr.rel (%p1586) target = $region48
        $region47: #{tpu_custom_call.1} parent=43 // pred_region
          %s1589 = sand.u32 %s97, 1
          %s1590 = scalar_lea.sflag [#allocation4], %s1589
          %s1591 = sand.u32 %s97, 1
          %s1592 = smul.addr %s1591, 256
          %s1593 = scalar_lea.vmem [#allocation7], %s1592
          %1594 = dma.done %s1590, 4096
        $region48: #{tpu_custom_call.1} parent=43 // pred_fallthru
          _
      $region44: #{tpu_custom_call.1} parent=5 // pred_fallthru
        _
    $region6: #{tpu_custom_call.1} parent=1 // loop_footer
      %s19 = sadd.s32 1, %s15
    $region7: #{tpu_custom_call.1} parent=1 // loop_footer_branch
      %14 = sbr.rel target = $region3
    $region8: #{tpu_custom_call.1} parent=1 // loop_exit
      _
    %1595 = vsyncpa [#allocation3], 1
    %s1596 = scalar_lea.sflag [#allocation3], 1
    %1597 = vsyncpa %s1596, 1
    %1598 = vsyncpa [#allocation6], 1
    %1599 = vsyncpa [#allocation4], 1
    %s1600 = scalar_lea.sflag [#allocation4], 1
    %1601 = vsyncpa %s1600, 1

</llo_original>
